<compile_context>
chip_gen: v5e
topology: v5e:2x2
jax: 0.10.0
libtpu: 0.0.40
codegen_flags: <defaults>
</compile_context>

<pallas_src>
from functools import partial

import jax
import jax.numpy as jnp
from jax import lax
from jax.experimental import pallas as pl
from jax.experimental.pallas import tpu as pltpu


def _round_up(x, m):
    return (x + m - 1) // m * m


# ---------------------------------------------------------------------------
# Kernels
# ---------------------------------------------------------------------------
def _accumulate_conv(vt_ref, vm_ref, vb_ref, w_ref, acc_ref, *, W):
    """3x3 conv on one (TH, W) row tile as 9 MXU matmuls, f32 VMEM accumulator.

    vt/vm/vb : (TH, W+2, Cin)   top/mid/bottom row-shifted input windows (bf16)
    w_ref    : (9, Cin, Cout_p) tap-major weights (bf16), VMEM-resident
    acc_ref  : (TH*W, Cout_p)   f32 VMEM scratch accumulator
    """
    TH, _, Cin = vt_ref.shape
    R = TH * W
    acc_ref[...] = jnp.zeros_like(acc_ref)
    tap = 0
    for v_ref in (vt_ref, vm_ref, vb_ref):          # kh = 0, 1, 2
        v = v_ref[...]                              # load the tile once
        for kw in range(3):
            patch = v[:, kw:kw + W, :].reshape(R, Cin)
            acc_ref[...] += jnp.dot(patch, w_ref[tap],
                                    preferred_element_type=jnp.float32)
            tap += 1
    # TODO(synk): for shallow layers (9*Cin <= 256) fuse the 9 taps into a
    #             single K=9*Cin matmul once unaligned lane-concat im2col is
    #             guaranteed on all target Mosaic versions.


def _conv_bias_stats_kernel(vt_ref, vm_ref, vb_ref, w_ref, b_ref,
                            y_ref, sum_ref, sq_ref, acc_ref, *, W):
    """Pass 1 (BatchNorm path): conv + bias; write the pre-activation tile and
    accumulate per-channel sum / sum-of-squares across the row-tile axis."""
    i = pl.program_id(1)
    _accumulate_conv(vt_ref, vm_ref, vb_ref, w_ref, acc_ref, W=W)
    y = acc_ref[...] + b_ref[...]                    # (TH*W, Cout_p) f32
    y_ref[...] = y

    @pl.when(i == 0)
    def _init():
        sum_ref[...] = jnp.zeros_like(sum_ref)
        sq_ref[...] = jnp.zeros_like(sq_ref)

    sum_ref[...] += jnp.sum(y, axis=0, keepdims=True)
    sq_ref[...] += jnp.sum(y * y, axis=0, keepdims=True)


def _conv_bias_relu_kernel(vt_ref, vm_ref, vb_ref, w_ref, b_ref,
                           out_ref, acc_ref, *, W):
    """No-BatchNorm path: conv + bias + ReLU fully fused."""
    _accumulate_conv(vt_ref, vm_ref, vb_ref, w_ref, acc_ref, W=W)
    out_ref[...] = jnp.maximum(acc_ref[...] + b_ref[...], 0.0)


def _scale_shift_relu_kernel(y_ref, scale_ref, shift_ref, out_ref):
    """Pass 2: y * scale + shift (folded BatchNorm affine) followed by ReLU."""
    out_ref[...] = jnp.maximum(y_ref[...] * scale_ref[...] + shift_ref[...], 0.0)


# ---------------------------------------------------------------------------
# Wrapper for one Conv->(BN)->ReLU block
# ---------------------------------------------------------------------------
def _pick_row_tile(H, W, cin, cout_pad, budget_bytes=6 * 1024 * 1024):
    """Largest divisor-of-H row tile whose double-buffered working set fits."""
    candidates = [th for th in range(1, H + 1)
                  if H % th == 0 and ((th * W) % 8 == 0 or th == H)]
    best = candidates[0]
    for th in candidates:
        in_b = 3 * th * (W + 2) * cin * 2            # bf16 shifted views
        out_b = th * W * cout_pad * 4                # f32 output tile
        acc_b = th * W * cout_pad * 4                # f32 accumulator scratch
        if 2 * (in_b + out_b) + acc_b <= budget_bytes and th * W <= 4096:
            best = th
    return best


def conv_bn_relu_block(x_nhwc, w_hwio, b, gamma, beta, *, eps=1e-5, use_bn=True,
                       row_tile=None, compute_dtype=jnp.bfloat16):
    """One unetConv2 sub-block on an NHWC input. Returns (N, H, W, Cout) f32."""
    N, H, W, Cin = x_nhwc.shape
    Cout = w_hwio.shape[-1]
    Cout_p = _round_up(max(Cout, 128), 128)          # lane-dense output channels

    if row_tile is None:
        row_tile = _pick_row_tile(H, W, Cin, Cout_p)
    TH = row_tile
    assert H % TH == 0, (H, TH)
    n_rows = H // TH
    grid = (N, n_rows)

    # padding=1 handled once in HBM; the 1-row halo is provided by three
    # row-shifted views so every BlockSpec is a plain Blocked tiling.
    # TODO(synk): replace the 3 shifted views with a single halo'd index_map
    #             (pl.Element) to avoid the 3x input HBM read.
    xpad = jnp.pad(x_nhwc, ((0, 0), (1, 1), (1, 1), (0, 0))).astype(compute_dtype)
    views = [xpad[:, kh:kh + H, :, :] for kh in range(3)]     # (N, H, W+2, Cin)

    # Weights: HWIO -> tap-major (9, Cin, Cout_p), zero-padded along Cout.
    w9 = w_hwio.reshape(9, Cin, Cout)
    w9 = jnp.pad(w9, ((0, 0), (0, 0), (0, Cout_p - Cout))).astype(compute_dtype)
    b_p = jnp.pad(b, (0, Cout_p - Cout)).reshape(1, Cout_p).astype(jnp.float32)

    view_spec = pl.BlockSpec((None, TH, W + 2, Cin), lambda n, i: (n, i, 0, 0))
    w_spec = pl.BlockSpec((9, Cin, Cout_p), lambda n, i: (0, 0, 0))   # resident
    b_spec = pl.BlockSpec((1, Cout_p), lambda n, i: (0, 0))           # resident
    row_spec = pl.BlockSpec((None, TH * W, Cout_p), lambda n, i: (n, i, 0))
    stat_spec = pl.BlockSpec((None, 1, Cout_p), lambda n, i: (n, 0, 0))
    vec_spec = pl.BlockSpec((1, Cout_p), lambda n, i: (0, 0))

    scratch = [pltpu.VMEM((TH * W, Cout_p), jnp.float32)]
    cost = pl.CostEstimate(
        flops=2 * N * H * W * 9 * Cin * Cout_p,
        transcendentals=0,
        bytes_accessed=(3 * N * H * (W + 2) * Cin * 2
                        + 9 * Cin * Cout_p * 2
                        + N * H * W * Cout_p * 4))
    vmem_limit = 32 * 1024 * 1024                    # fits all generations

    if use_bn:
        y, ysum, ysq = pl.pallas_call(
            partial(_conv_bias_stats_kernel, W=W),
            grid=grid,
            in_specs=[view_spec, view_spec, view_spec, w_spec, b_spec],
            out_specs=(row_spec, stat_spec, stat_spec),
            out_shape=(
                jax.ShapeDtypeStruct((N, H * W, Cout_p), jnp.float32),
                jax.ShapeDtypeStruct((N, 1, Cout_p), jnp.float32),
                jax.ShapeDtypeStruct((N, 1, Cout_p), jnp.float32),
            ),
            scratch_shapes=scratch,
            compiler_params=pltpu.CompilerParams(
                dimension_semantics=("parallel", "arbitrary"),
                vmem_limit_bytes=vmem_limit),
            cost_estimate=cost,
        )(views[0], views[1], views[2], w9, b_p)

        # Fold batch statistics into per-channel scale/shift (tiny XLA glue).
        cnt = float(N * H * W)
        mean = jnp.sum(ysum, axis=(0, 1)) / cnt                   # (Cout_p,)
        var = jnp.maximum(jnp.sum(ysq, axis=(0, 1)) / cnt - mean * mean, 0.0)
        gamma_p = jnp.pad(gamma.astype(jnp.float32), (0, Cout_p - Cout))
        beta_p = jnp.pad(beta.astype(jnp.float32), (0, Cout_p - Cout))
        scale = gamma_p * lax.rsqrt(var + eps)
        shift = beta_p - mean * scale
        scale = scale.reshape(1, Cout_p)
        shift = shift.reshape(1, Cout_p)

        out2d = pl.pallas_call(
            _scale_shift_relu_kernel,
            grid=grid,
            in_specs=[row_spec, vec_spec, vec_spec],
            out_specs=row_spec,
            out_shape=jax.ShapeDtypeStruct((N, H * W, Cout_p), jnp.float32),
            compiler_params=pltpu.CompilerParams(
                dimension_semantics=("parallel", "parallel"),
                vmem_limit_bytes=vmem_limit),
        )(y, scale, shift)
    else:
        out2d = pl.pallas_call(
            partial(_conv_bias_relu_kernel, W=W),
            grid=grid,
            in_specs=[view_spec, view_spec, view_spec, w_spec, b_spec],
            out_specs=row_spec,
            out_shape=jax.ShapeDtypeStruct((N, H * W, Cout_p), jnp.float32),
            scratch_shapes=scratch,
            compiler_params=pltpu.CompilerParams(
                dimension_semantics=("parallel", "parallel"),
                vmem_limit_bytes=vmem_limit),
            cost_estimate=cost,
        )(views[0], views[1], views[2], w9, b_p)

    # NHWC reshape + channel un-padding are cheap wrapper-side layout ops.
    return out2d.reshape(N, H, W, Cout_p)[..., :Cout]


# ---------------------------------------------------------------------------
# Parameter construction matching unetConv2.__init__ (kaiming fan_in init).
# ---------------------------------------------------------------------------
def init_unet_conv2_params(key, in_size, out_size, is_batchnorm, n=2, ks=3):
    params = []
    cin = in_size
    for _ in range(n):
        key, kw_key, kb_key, kg_key = jax.random.split(key, 4)
        fan_in = cin * ks * ks
        std = (2.0 / fan_in) ** 0.5                      # kaiming_normal_, a=0, fan_in
        # PyTorch weight layout (Cout,Cin,kh,kw) -> HWIO (kh,kw,Cin,Cout)
        w_oihw = std * jax.random.normal(kw_key, (out_size, cin, ks, ks), jnp.float32)
        w_hwio = jnp.transpose(w_oihw, (2, 3, 1, 0))
        bound = 1.0 / (fan_in ** 0.5)                    # default Conv2d bias init
        b = jax.random.uniform(kb_key, (out_size,), jnp.float32, -bound, bound)
        if is_batchnorm:
            gamma = 1.0 + 0.02 * jax.random.normal(kg_key, (out_size,), jnp.float32)
            beta = jnp.zeros((out_size,), jnp.float32)
        else:
            gamma = jnp.ones((out_size,), jnp.float32)
            beta = jnp.zeros((out_size,), jnp.float32)
        params.append(dict(w=w_hwio, b=b, gamma=gamma, beta=beta))
        cin = out_size
    return params


def unet_conv2_forward(x_nchw, params, is_batchnorm, *, row_tile=None):
    """Forward pass of unetConv2. Input/output are NCHW (PyTorch convention)."""
    x = jnp.transpose(x_nchw, (0, 2, 3, 1))              # NCHW -> NHWC
    for p in params:
        x = conv_bn_relu_block(x, p["w"], p["b"], p["gamma"], p["beta"],
                               use_bn=is_batchnorm, row_tile=row_tile)
    return jnp.transpose(x, (0, 3, 1, 2))                # NHWC -> NCHW


# ---------------------------------------------------------------------------
# Pure-JAX reference (same bf16 MXU operands, f32 accumulation / BN math).
# ---------------------------------------------------------------------------
def _reference_forward(x_nchw, params, is_batchnorm, eps=1e-5,
                       compute_dtype=jnp.bfloat16):
    x = jnp.transpose(x_nchw, (0, 2, 3, 1))
    for p in params:
        y = lax.conv_general_dilated(
            x.astype(compute_dtype), p["w"].astype(compute_dtype),
            window_strides=(1, 1), padding=((1, 1), (1, 1)),
            dimension_numbers=("NHWC", "HWIO", "NHWC"),
            preferred_element_type=jnp.float32)
        y = y + p["b"]
        if is_batchnorm:
            mean = jnp.mean(y, axis=(0, 1, 2))
            var = jnp.mean((y - mean) ** 2, axis=(0, 1, 2))
            y = (y - mean) * lax.rsqrt(var + eps)
            y = y * p["gamma"] + p["beta"]
        x = jnp.maximum(y, 0.0)
    return jnp.transpose(x, (0, 3, 1, 2))


if __name__ == "__main__":
    key = jax.random.PRNGKey(0)
    key, xk = jax.random.split(key)

    # Small shapes consistent with the module: batch=2, in=4, out=8, spatial=16.
    N, Cin, Cout, H, W = 2, 4, 8, 16, 16
    x = jax.random.normal(xk, (N, Cin, H, W), jnp.float32)

    for is_batchnorm in (True, False):
        params = init_unet_conv2_params(jax.random.PRNGKey(1), Cin, Cout,
                                        is_batchnorm, n=2, ks=3)
        # row_tile=8 -> grid (N, 2): exercises multi-tile streaming BN stats.
        y = unet_conv2_forward(x, params, is_batchnorm, row_tile=8)
        jax.block_until_ready(y)

        assert y.shape == (N, Cout, H, W), y.shape
        assert bool(jnp.all(y >= 0.0))                   # ReLU output
        assert bool(jnp.all(jnp.isfinite(y)))

        y_ref = _reference_forward(x, params, is_batchnorm)
        err = float(jnp.max(jnp.abs(y - y_ref)))
        assert err < 2e-2, f"max abs err vs reference: {err}"

    print("KERNEL_OK")
</pallas_src>

<mosaic_0001>
module attributes {stable_mosaic.version = 11 : i64} {
  func.func @_conv_bias_stats_kernel(%arg0: i32, %arg1: i32, %arg2: memref<1x8x18x4xbf16, #tpu.memory_space<vmem>>, %arg3: memref<1x8x18x4xbf16, #tpu.memory_space<vmem>>, %arg4: memref<1x8x18x4xbf16, #tpu.memory_space<vmem>>, %arg5: memref<9x4x128xbf16, #tpu.memory_space<vmem>>, %arg6: memref<1x128xf32, #tpu.memory_space<vmem>>, %arg7: memref<1x128x128xf32, #tpu.memory_space<vmem>>, %arg8: memref<1x1x128xf32, #tpu.memory_space<vmem>>, %arg9: memref<1x1x128xf32, #tpu.memory_space<vmem>>, %arg10: memref<128x128xf32, #tpu.memory_space<vmem>>) attributes {dimension_semantics = [#tpu.dimension_semantics<parallel>, #tpu.dimension_semantics<arbitrary>], iteration_bounds = array<i64: 2, 2>, scalar_prefetch = 0 : i64, scratch_operands = 1 : i64, tpu.core_type = #tpu.core_type<tc>, window_params = [{transform_indices = @transform_0, window_bounds = array<i64: 1, 8, 18, 4>}, {transform_indices = @transform_1, window_bounds = array<i64: 1, 8, 18, 4>}, {transform_indices = @transform_2, window_bounds = array<i64: 1, 8, 18, 4>}, {pipeline_mode = #tpu.pipeline_mode<synchronous>, transform_indices = @transform_3, window_bounds = array<i64: 9, 4, 128>}, {pipeline_mode = #tpu.pipeline_mode<synchronous>, transform_indices = @transform_4, window_bounds = array<i64: 1, 128>}, {transform_indices = @transform_5, window_bounds = array<i64: 1, 128, 128>}, {transform_indices = @transform_6, window_bounds = array<i64: 1, 1, 128>}, {transform_indices = @transform_7, window_bounds = array<i64: 1, 1, 128>}]} {
    %cst = arith.constant 0.000000e+00 : f32
    %0 = vector.broadcast %cst : f32 to vector<128x128xf32>
    %c0 = arith.constant 0 : index
    %c0_0 = arith.constant 0 : index
    %1 = vector.load %arg10[%c0, %c0_0] : memref<128x128xf32, #tpu.memory_space<vmem>>, vector<128x128xf32>
    tpu.vector_store %arg10[%c0, %c0_0], %0 {strides = array<i32>} : memref<128x128xf32, #tpu.memory_space<vmem>>, vector<128x128xf32>,
    %c0_1 = arith.constant 0 : index
    %c0_2 = arith.constant 0 : index
    %c0_3 = arith.constant 0 : index
    %c0_4 = arith.constant 0 : index
    %2 = vector.load %arg2[%c0_1, %c0_2, %c0_3, %c0_4] : memref<1x8x18x4xbf16, #tpu.memory_space<vmem>>, vector<1x8x18x4xbf16>
    %3 = vector.shape_cast %2 : vector<1x8x18x4xbf16> to vector<8x18x4xbf16>
    %4 = vector.extract_strided_slice %3 {offsets = [0, 0, 0], sizes = [8, 16, 4], strides = [1, 1, 1]} : vector<8x18x4xbf16> to vector<8x16x4xbf16>
    %5 = vector.shape_cast %4 : vector<8x16x4xbf16> to vector<128x4xbf16>
    %c0_5 = arith.constant 0 : index
    %c0_6 = arith.constant 0 : index
    %6 = vector.load %arg10[%c0_5, %c0_6] : memref<128x128xf32, #tpu.memory_space<vmem>>, vector<128x128xf32>
    %c0_7 = arith.constant 0 : index
    %c0_8 = arith.constant 0 : index
    %c0_9 = arith.constant 0 : index
    %7 = vector.load %arg5[%c0_7, %c0_8, %c0_9] : memref<9x4x128xbf16, #tpu.memory_space<vmem>>, vector<1x4x128xbf16>
    %8 = vector.shape_cast %7 : vector<1x4x128xbf16> to vector<4x128xbf16>
    %cst_10 = arith.constant dense<0.000000e+00> : vector<128x128xf32>
    %9 = tpu.matmul %5, %8, %cst_10 {dimension_numbers = #tpu.dot_dimension_numbers<[1], [0], [0], [1], [0, 0, 1, 1], [], []>} : vector<128x4xbf16>, vector<4x128xbf16>, vector<128x128xf32> -> vector<128x128xf32>
    %10 = arith.addf %6, %9 : vector<128x128xf32>
    %c0_11 = arith.constant 0 : index
    %c0_12 = arith.constant 0 : index
    %11 = vector.load %arg10[%c0_11, %c0_12] : memref<128x128xf32, #tpu.memory_space<vmem>>, vector<128x128xf32>
    tpu.vector_store %arg10[%c0_11, %c0_12], %10 {strides = array<i32>} : memref<128x128xf32, #tpu.memory_space<vmem>>, vector<128x128xf32>,
    %12 = vector.extract_strided_slice %3 {offsets = [0, 1, 0], sizes = [8, 16, 4], strides = [1, 1, 1]} : vector<8x18x4xbf16> to vector<8x16x4xbf16>
    %13 = vector.shape_cast %12 : vector<8x16x4xbf16> to vector<128x4xbf16>
    %c0_13 = arith.constant 0 : index
    %c0_14 = arith.constant 0 : index
    %14 = vector.load %arg10[%c0_13, %c0_14] : memref<128x128xf32, #tpu.memory_space<vmem>>, vector<128x128xf32>
    %c1 = arith.constant 1 : index
    %c0_15 = arith.constant 0 : index
    %c0_16 = arith.constant 0 : index
    %15 = vector.load %arg5[%c1, %c0_15, %c0_16] : memref<9x4x128xbf16, #tpu.memory_space<vmem>>, vector<1x4x128xbf16>
    %16 = vector.shape_cast %15 : vector<1x4x128xbf16> to vector<4x128xbf16>
    %cst_17 = arith.constant dense<0.000000e+00> : vector<128x128xf32>
    %17 = tpu.matmul %13, %16, %cst_17 {dimension_numbers = #tpu.dot_dimension_numbers<[1], [0], [0], [1], [0, 0, 1, 1], [], []>} : vector<128x4xbf16>, vector<4x128xbf16>, vector<128x128xf32> -> vector<128x128xf32>
    %18 = arith.addf %14, %17 : vector<128x128xf32>
    %c0_18 = arith.constant 0 : index
    %c0_19 = arith.constant 0 : index
    %19 = vector.load %arg10[%c0_18, %c0_19] : memref<128x128xf32, #tpu.memory_space<vmem>>, vector<128x128xf32>
    tpu.vector_store %arg10[%c0_18, %c0_19], %18 {strides = array<i32>} : memref<128x128xf32, #tpu.memory_space<vmem>>, vector<128x128xf32>,
    %20 = vector.extract_strided_slice %3 {offsets = [0, 2, 0], sizes = [8, 16, 4], strides = [1, 1, 1]} : vector<8x18x4xbf16> to vector<8x16x4xbf16>
    %21 = vector.shape_cast %20 : vector<8x16x4xbf16> to vector<128x4xbf16>
    %c0_20 = arith.constant 0 : index
    %c0_21 = arith.constant 0 : index
    %22 = vector.load %arg10[%c0_20, %c0_21] : memref<128x128xf32, #tpu.memory_space<vmem>>, vector<128x128xf32>
    %c2 = arith.constant 2 : index
    %c0_22 = arith.constant 0 : index
    %c0_23 = arith.constant 0 : index
    %23 = vector.load %arg5[%c2, %c0_22, %c0_23] : memref<9x4x128xbf16, #tpu.memory_space<vmem>>, vector<1x4x128xbf16>
    %24 = vector.shape_cast %23 : vector<1x4x128xbf16> to vector<4x128xbf16>
    %cst_24 = arith.constant dense<0.000000e+00> : vector<128x128xf32>
    %25 = tpu.matmul %21, %24, %cst_24 {dimension_numbers = #tpu.dot_dimension_numbers<[1], [0], [0], [1], [0, 0, 1, 1], [], []>} : vector<128x4xbf16>, vector<4x128xbf16>, vector<128x128xf32> -> vector<128x128xf32>
    %26 = arith.addf %22, %25 : vector<128x128xf32>
    %c0_25 = arith.constant 0 : index
    %c0_26 = arith.constant 0 : index
    %27 = vector.load %arg10[%c0_25, %c0_26] : memref<128x128xf32, #tpu.memory_space<vmem>>, vector<128x128xf32>
    tpu.vector_store %arg10[%c0_25, %c0_26], %26 {strides = array<i32>} : memref<128x128xf32, #tpu.memory_space<vmem>>, vector<128x128xf32>,
    %c0_27 = arith.constant 0 : index
    %c0_28 = arith.constant 0 : index
    %c0_29 = arith.constant 0 : index
    %c0_30 = arith.constant 0 : index
    %28 = vector.load %arg3[%c0_27, %c0_28, %c0_29, %c0_30] : memref<1x8x18x4xbf16, #tpu.memory_space<vmem>>, vector<1x8x18x4xbf16>
    %29 = vector.shape_cast %28 : vector<1x8x18x4xbf16> to vector<8x18x4xbf16>
    %30 = vector.extract_strided_slice %29 {offsets = [0, 0, 0], sizes = [8, 16, 4], strides = [1, 1, 1]} : vector<8x18x4xbf16> to vector<8x16x4xbf16>
    %31 = vector.shape_cast %30 : vector<8x16x4xbf16> to vector<128x4xbf16>
    %c0_31 = arith.constant 0 : index
    %c0_32 = arith.constant 0 : index
    %32 = vector.load %arg10[%c0_31, %c0_32] : memref<128x128xf32, #tpu.memory_space<vmem>>, vector<128x128xf32>
    %c3 = arith.constant 3 : index
    %c0_33 = arith.constant 0 : index
    %c0_34 = arith.constant 0 : index
    %33 = vector.load %arg5[%c3, %c0_33, %c0_34] : memref<9x4x128xbf16, #tpu.memory_space<vmem>>, vector<1x4x128xbf16>
    %34 = vector.shape_cast %33 : vector<1x4x128xbf16> to vector<4x128xbf16>
    %cst_35 = arith.constant dense<0.000000e+00> : vector<128x128xf32>
    %35 = tpu.matmul %31, %34, %cst_35 {dimension_numbers = #tpu.dot_dimension_numbers<[1], [0], [0], [1], [0, 0, 1, 1], [], []>} : vector<128x4xbf16>, vector<4x128xbf16>, vector<128x128xf32> -> vector<128x128xf32>
    %36 = arith.addf %32, %35 : vector<128x128xf32>
    %c0_36 = arith.constant 0 : index
    %c0_37 = arith.constant 0 : index
    %37 = vector.load %arg10[%c0_36, %c0_37] : memref<128x128xf32, #tpu.memory_space<vmem>>, vector<128x128xf32>
    tpu.vector_store %arg10[%c0_36, %c0_37], %36 {strides = array<i32>} : memref<128x128xf32, #tpu.memory_space<vmem>>, vector<128x128xf32>,
    %38 = vector.extract_strided_slice %29 {offsets = [0, 1, 0], sizes = [8, 16, 4], strides = [1, 1, 1]} : vector<8x18x4xbf16> to vector<8x16x4xbf16>
    %39 = vector.shape_cast %38 : vector<8x16x4xbf16> to vector<128x4xbf16>
    %c0_38 = arith.constant 0 : index
    %c0_39 = arith.constant 0 : index
    %40 = vector.load %arg10[%c0_38, %c0_39] : memref<128x128xf32, #tpu.memory_space<vmem>>, vector<128x128xf32>
    %c4 = arith.constant 4 : index
    %c0_40 = arith.constant 0 : index
    %c0_41 = arith.constant 0 : index
    %41 = vector.load %arg5[%c4, %c0_40, %c0_41] : memref<9x4x128xbf16, #tpu.memory_space<vmem>>, vector<1x4x128xbf16>
    %42 = vector.shape_cast %41 : vector<1x4x128xbf16> to vector<4x128xbf16>
    %cst_42 = arith.constant dense<0.000000e+00> : vector<128x128xf32>
    %43 = tpu.matmul %39, %42, %cst_42 {dimension_numbers = #tpu.dot_dimension_numbers<[1], [0], [0], [1], [0, 0, 1, 1], [], []>} : vector<128x4xbf16>, vector<4x128xbf16>, vector<128x128xf32> -> vector<128x128xf32>
    %44 = arith.addf %40, %43 : vector<128x128xf32>
    %c0_43 = arith.constant 0 : index
    %c0_44 = arith.constant 0 : index
    %45 = vector.load %arg10[%c0_43, %c0_44] : memref<128x128xf32, #tpu.memory_space<vmem>>, vector<128x128xf32>
    tpu.vector_store %arg10[%c0_43, %c0_44], %44 {strides = array<i32>} : memref<128x128xf32, #tpu.memory_space<vmem>>, vector<128x128xf32>,
    %46 = vector.extract_strided_slice %29 {offsets = [0, 2, 0], sizes = [8, 16, 4], strides = [1, 1, 1]} : vector<8x18x4xbf16> to vector<8x16x4xbf16>
    %47 = vector.shape_cast %46 : vector<8x16x4xbf16> to vector<128x4xbf16>
    %c0_45 = arith.constant 0 : index
    %c0_46 = arith.constant 0 : index
    %48 = vector.load %arg10[%c0_45, %c0_46] : memref<128x128xf32, #tpu.memory_space<vmem>>, vector<128x128xf32>
    %c5 = arith.constant 5 : index
    %c0_47 = arith.constant 0 : index
    %c0_48 = arith.constant 0 : index
    %49 = vector.load %arg5[%c5, %c0_47, %c0_48] : memref<9x4x128xbf16, #tpu.memory_space<vmem>>, vector<1x4x128xbf16>
    %50 = vector.shape_cast %49 : vector<1x4x128xbf16> to vector<4x128xbf16>
    %cst_49 = arith.constant dense<0.000000e+00> : vector<128x128xf32>
    %51 = tpu.matmul %47, %50, %cst_49 {dimension_numbers = #tpu.dot_dimension_numbers<[1], [0], [0], [1], [0, 0, 1, 1], [], []>} : vector<128x4xbf16>, vector<4x128xbf16>, vector<128x128xf32> -> vector<128x128xf32>
    %52 = arith.addf %48, %51 : vector<128x128xf32>
    %c0_50 = arith.constant 0 : index
    %c0_51 = arith.constant 0 : index
    %53 = vector.load %arg10[%c0_50, %c0_51] : memref<128x128xf32, #tpu.memory_space<vmem>>, vector<128x128xf32>
    tpu.vector_store %arg10[%c0_50, %c0_51], %52 {strides = array<i32>} : memref<128x128xf32, #tpu.memory_space<vmem>>, vector<128x128xf32>,
    %c0_52 = arith.constant 0 : index
    %c0_53 = arith.constant 0 : index
    %c0_54 = arith.constant 0 : index
    %c0_55 = arith.constant 0 : index
    %54 = vector.load %arg4[%c0_52, %c0_53, %c0_54, %c0_55] : memref<1x8x18x4xbf16, #tpu.memory_space<vmem>>, vector<1x8x18x4xbf16>
    %55 = vector.shape_cast %54 : vector<1x8x18x4xbf16> to vector<8x18x4xbf16>
    %56 = vector.extract_strided_slice %55 {offsets = [0, 0, 0], sizes = [8, 16, 4], strides = [1, 1, 1]} : vector<8x18x4xbf16> to vector<8x16x4xbf16>
    %57 = vector.shape_cast %56 : vector<8x16x4xbf16> to vector<128x4xbf16>
    %c0_56 = arith.constant 0 : index
    %c0_57 = arith.constant 0 : index
    %58 = vector.load %arg10[%c0_56, %c0_57] : memref<128x128xf32, #tpu.memory_space<vmem>>, vector<128x128xf32>
    %c6 = arith.constant 6 : index
    %c0_58 = arith.constant 0 : index
    %c0_59 = arith.constant 0 : index
    %59 = vector.load %arg5[%c6, %c0_58, %c0_59] : memref<9x4x128xbf16, #tpu.memory_space<vmem>>, vector<1x4x128xbf16>
    %60 = vector.shape_cast %59 : vector<1x4x128xbf16> to vector<4x128xbf16>
    %cst_60 = arith.constant dense<0.000000e+00> : vector<128x128xf32>
    %61 = tpu.matmul %57, %60, %cst_60 {dimension_numbers = #tpu.dot_dimension_numbers<[1], [0], [0], [1], [0, 0, 1, 1], [], []>} : vector<128x4xbf16>, vector<4x128xbf16>, vector<128x128xf32> -> vector<128x128xf32>
    %62 = arith.addf %58, %61 : vector<128x128xf32>
    %c0_61 = arith.constant 0 : index
    %c0_62 = arith.constant 0 : index
    %63 = vector.load %arg10[%c0_61, %c0_62] : memref<128x128xf32, #tpu.memory_space<vmem>>, vector<128x128xf32>
    tpu.vector_store %arg10[%c0_61, %c0_62], %62 {strides = array<i32>} : memref<128x128xf32, #tpu.memory_space<vmem>>, vector<128x128xf32>,
    %64 = vector.extract_strided_slice %55 {offsets = [0, 1, 0], sizes = [8, 16, 4], strides = [1, 1, 1]} : vector<8x18x4xbf16> to vector<8x16x4xbf16>
    %65 = vector.shape_cast %64 : vector<8x16x4xbf16> to vector<128x4xbf16>
    %c0_63 = arith.constant 0 : index
    %c0_64 = arith.constant 0 : index
    %66 = vector.load %arg10[%c0_63, %c0_64] : memref<128x128xf32, #tpu.memory_space<vmem>>, vector<128x128xf32>
    %c7 = arith.constant 7 : index
    %c0_65 = arith.constant 0 : index
    %c0_66 = arith.constant 0 : index
    %67 = vector.load %arg5[%c7, %c0_65, %c0_66] : memref<9x4x128xbf16, #tpu.memory_space<vmem>>, vector<1x4x128xbf16>
    %68 = vector.shape_cast %67 : vector<1x4x128xbf16> to vector<4x128xbf16>
    %cst_67 = arith.constant dense<0.000000e+00> : vector<128x128xf32>
    %69 = tpu.matmul %65, %68, %cst_67 {dimension_numbers = #tpu.dot_dimension_numbers<[1], [0], [0], [1], [0, 0, 1, 1], [], []>} : vector<128x4xbf16>, vector<4x128xbf16>, vector<128x128xf32> -> vector<128x128xf32>
    %70 = arith.addf %66, %69 : vector<128x128xf32>
    %c0_68 = arith.constant 0 : index
    %c0_69 = arith.constant 0 : index
    %71 = vector.load %arg10[%c0_68, %c0_69] : memref<128x128xf32, #tpu.memory_space<vmem>>, vector<128x128xf32>
    tpu.vector_store %arg10[%c0_68, %c0_69], %70 {strides = array<i32>} : memref<128x128xf32, #tpu.memory_space<vmem>>, vector<128x128xf32>,
    %72 = vector.extract_strided_slice %55 {offsets = [0, 2, 0], sizes = [8, 16, 4], strides = [1, 1, 1]} : vector<8x18x4xbf16> to vector<8x16x4xbf16>
    %73 = vector.shape_cast %72 : vector<8x16x4xbf16> to vector<128x4xbf16>
    %c0_70 = arith.constant 0 : index
    %c0_71 = arith.constant 0 : index
    %74 = vector.load %arg10[%c0_70, %c0_71] : memref<128x128xf32, #tpu.memory_space<vmem>>, vector<128x128xf32>
    %c8 = arith.constant 8 : index
    %c0_72 = arith.constant 0 : index
    %c0_73 = arith.constant 0 : index
    %75 = vector.load %arg5[%c8, %c0_72, %c0_73] : memref<9x4x128xbf16, #tpu.memory_space<vmem>>, vector<1x4x128xbf16>
    %76 = vector.shape_cast %75 : vector<1x4x128xbf16> to vector<4x128xbf16>
    %cst_74 = arith.constant dense<0.000000e+00> : vector<128x128xf32>
    %77 = tpu.matmul %73, %76, %cst_74 {dimension_numbers = #tpu.dot_dimension_numbers<[1], [0], [0], [1], [0, 0, 1, 1], [], []>} : vector<128x4xbf16>, vector<4x128xbf16>, vector<128x128xf32> -> vector<128x128xf32>
    %78 = arith.addf %74, %77 : vector<128x128xf32>
    %c0_75 = arith.constant 0 : index
    %c0_76 = arith.constant 0 : index
    %79 = vector.load %arg10[%c0_75, %c0_76] : memref<128x128xf32, #tpu.memory_space<vmem>>, vector<128x128xf32>
    tpu.vector_store %arg10[%c0_75, %c0_76], %78 {strides = array<i32>} : memref<128x128xf32, #tpu.memory_space<vmem>>, vector<128x128xf32>,
    %c0_77 = arith.constant 0 : index
    %c0_78 = arith.constant 0 : index
    %80 = vector.load %arg10[%c0_77, %c0_78] : memref<128x128xf32, #tpu.memory_space<vmem>>, vector<128x128xf32>
    %c0_79 = arith.constant 0 : index
    %c0_80 = arith.constant 0 : index
    %81 = vector.load %arg6[%c0_79, %c0_80] : memref<1x128xf32, #tpu.memory_space<vmem>>, vector<1x128xf32>
    %82 = vector.broadcast %81 : vector<1x128xf32> to vector<128x128xf32>
    %83 = arith.addf %80, %82 : vector<128x128xf32>
    %c0_81 = arith.constant 0 : index
    %c0_82 = arith.constant 0 : index
    %c0_83 = arith.constant 0 : index
    %84 = vector.load %arg7[%c0_81, %c0_82, %c0_83] : memref<1x128x128xf32, #tpu.memory_space<vmem>>, vector<1x128x128xf32>
    %85 = vector.shape_cast %84 : vector<1x128x128xf32> to vector<128x128xf32>
    %86 = vector.shape_cast %83 : vector<128x128xf32> to vector<1x128x128xf32>
    tpu.vector_store %arg7[%c0_81, %c0_82, %c0_83], %86 {strides = array<i32>} : memref<1x128x128xf32, #tpu.memory_space<vmem>>, vector<1x128x128xf32>,
    %c0_i32 = arith.constant 0 : i32
    %87 = arith.cmpi eq, %arg1, %c0_i32 : i32
    %88 = arith.extui %87 : i1 to i32
    %c0_i32_84 = arith.constant 0 : i32
    %89 = arith.cmpi ne, %88, %c0_i32_84 : i32
    scf.if %89 {
      %cst_99 = arith.constant 0.000000e+00 : f32
      %107 = vector.broadcast %cst_99 : f32 to vector<1x128xf32>
      %c0_100 = arith.constant 0 : index
      %c0_101 = arith.constant 0 : index
      %c0_102 = arith.constant 0 : index
      %108 = vector.load %arg8[%c0_100, %c0_101, %c0_102] : memref<1x1x128xf32, #tpu.memory_space<vmem>>, vector<1x1x128xf32>
      %109 = vector.shape_cast %108 : vector<1x1x128xf32> to vector<1x128xf32>
      %110 = vector.shape_cast %107 : vector<1x128xf32> to vector<1x1x128xf32>
      tpu.vector_store %arg8[%c0_100, %c0_101, %c0_102], %110 {strides = array<i32>} : memref<1x1x128xf32, #tpu.memory_space<vmem>>, vector<1x1x128xf32>,
      %cst_103 = arith.constant 0.000000e+00 : f32
      %111 = vector.broadcast %cst_103 : f32 to vector<1x128xf32>
      %c0_104 = arith.constant 0 : index
      %c0_105 = arith.constant 0 : index
      %c0_106 = arith.constant 0 : index
      %112 = vector.load %arg9[%c0_104, %c0_105, %c0_106] : memref<1x1x128xf32, #tpu.memory_space<vmem>>, vector<1x1x128xf32>
      %113 = vector.shape_cast %112 : vector<1x1x128xf32> to vector<1x128xf32>
      %114 = vector.shape_cast %111 : vector<1x128xf32> to vector<1x1x128xf32>
      tpu.vector_store %arg9[%c0_104, %c0_105, %c0_106], %114 {strides = array<i32>} : memref<1x1x128xf32, #tpu.memory_space<vmem>>, vector<1x1x128xf32>,
    } else {
    }
    %c0_85 = arith.constant 0 : index
    %c0_86 = arith.constant 0 : index
    %c0_87 = arith.constant 0 : index
    %90 = vector.load %arg8[%c0_85, %c0_86, %c0_87] : memref<1x1x128xf32, #tpu.memory_space<vmem>>, vector<1x1x128xf32>
    %91 = vector.shape_cast %90 : vector<1x1x128xf32> to vector<1x128xf32>
    %cst_88 = arith.constant dense<0.000000e+00> : vector<128xf32>
    %92 = vector.multi_reduction <add>, %83, %cst_88 [0] : vector<128x128xf32> to vector<128xf32>
    %93 = vector.shape_cast %92 : vector<128xf32> to vector<1x128xf32>
    %94 = arith.addf %91, %93 : vector<1x128xf32>
    %c0_89 = arith.constant 0 : index
    %c0_90 = arith.constant 0 : index
    %c0_91 = arith.constant 0 : index
    %95 = vector.load %arg8[%c0_89, %c0_90, %c0_91] : memref<1x1x128xf32, #tpu.memory_space<vmem>>, vector<1x1x128xf32>
    %96 = vector.shape_cast %95 : vector<1x1x128xf32> to vector<1x128xf32>
    %97 = vector.shape_cast %94 : vector<1x128xf32> to vector<1x1x128xf32>
    tpu.vector_store %arg8[%c0_89, %c0_90, %c0_91], %97 {strides = array<i32>} : memref<1x1x128xf32, #tpu.memory_space<vmem>>, vector<1x1x128xf32>,
    %c0_92 = arith.constant 0 : index
    %c0_93 = arith.constant 0 : index
    %c0_94 = arith.constant 0 : index
    %98 = vector.load %arg9[%c0_92, %c0_93, %c0_94] : memref<1x1x128xf32, #tpu.memory_space<vmem>>, vector<1x1x128xf32>
    %99 = vector.shape_cast %98 : vector<1x1x128xf32> to vector<1x128xf32>
    %100 = arith.mulf %83, %83 : vector<128x128xf32>
    %cst_95 = arith.constant dense<0.000000e+00> : vector<128xf32>
    %101 = vector.multi_reduction <add>, %100, %cst_95 [0] : vector<128x128xf32> to vector<128xf32>
    %102 = vector.shape_cast %101 : vector<128xf32> to vector<1x128xf32>
    %103 = arith.addf %99, %102 : vector<1x128xf32>
    %c0_96 = arith.constant 0 : index
    %c0_97 = arith.constant 0 : index
    %c0_98 = arith.constant 0 : index
    %104 = vector.load %arg9[%c0_96, %c0_97, %c0_98] : memref<1x1x128xf32, #tpu.memory_space<vmem>>, vector<1x1x128xf32>
    %105 = vector.shape_cast %104 : vector<1x1x128xf32> to vector<1x128xf32>
    %106 = vector.shape_cast %103 : vector<1x128xf32> to vector<1x1x128xf32>
    tpu.vector_store %arg9[%c0_96, %c0_97, %c0_98], %106 {strides = array<i32>} : memref<1x1x128xf32, #tpu.memory_space<vmem>>, vector<1x1x128xf32>,
    return
  }
  func.func @transform_0(%arg0: i32, %arg1: i32) -> (i32, i32, i32, i32) {
    %c0_i32 = arith.constant 0 : i32
    %c0_i32_0 = arith.constant 0 : i32
    %c0_i32_1 = arith.constant 0 : i32
    return %arg0, %arg1, %c0_i32, %c0_i32_0 : i32, i32, i32, i32
  }
  func.func @transform_1(%arg0: i32, %arg1: i32) -> (i32, i32, i32, i32) {
    %c0_i32 = arith.constant 0 : i32
    %c0_i32_0 = arith.constant 0 : i32
    %c0_i32_1 = arith.constant 0 : i32
    return %arg0, %arg1, %c0_i32, %c0_i32_0 : i32, i32, i32, i32
  }
  func.func @transform_2(%arg0: i32, %arg1: i32) -> (i32, i32, i32, i32) {
    %c0_i32 = arith.constant 0 : i32
    %c0_i32_0 = arith.constant 0 : i32
    %c0_i32_1 = arith.constant 0 : i32
    return %arg0, %arg1, %c0_i32, %c0_i32_0 : i32, i32, i32, i32
  }
  func.func @transform_3(%arg0: i32, %arg1: i32) -> (i32, i32, i32) {
    %c0_i32 = arith.constant 0 : i32
    %c0_i32_0 = arith.constant 0 : i32
    %c0_i32_1 = arith.constant 0 : i32
    %c0_i32_2 = arith.constant 0 : i32
    return %c0_i32, %c0_i32_0, %c0_i32_1 : i32, i32, i32
  }
  func.func @transform_4(%arg0: i32, %arg1: i32) -> (i32, i32) {
    %c0_i32 = arith.constant 0 : i32
    %c0_i32_0 = arith.constant 0 : i32
    %c0_i32_1 = arith.constant 0 : i32
    return %c0_i32, %c0_i32_0 : i32, i32
  }
  func.func @transform_5(%arg0: i32, %arg1: i32) -> (i32, i32, i32) {
    %c0_i32 = arith.constant 0 : i32
    %c0_i32_0 = arith.constant 0 : i32
    return %arg0, %arg1, %c0_i32 : i32, i32, i32
  }
  func.func @transform_6(%arg0: i32, %arg1: i32) -> (i32, i32, i32) {
    %c0_i32 = arith.constant 0 : i32
    %c0_i32_0 = arith.constant 0 : i32
    %c0_i32_1 = arith.constant 0 : i32
    return %arg0, %c0_i32, %c0_i32_0 : i32, i32, i32
  }
  func.func @transform_7(%arg0: i32, %arg1: i32) -> (i32, i32, i32) {
    %c0_i32 = arith.constant 0 : i32
    %c0_i32_0 = arith.constant 0 : i32
    %c0_i32_1 = arith.constant 0 : i32
    return %arg0, %c0_i32, %c0_i32_0 : i32, i32, i32
  }
}

</mosaic_0001>

<llo_original>
// kernel: tpu_custom_call.1
$region0: #{tpu_custom_call.1}
  #allocation0 [shape = 'u32[]', space=smem, size = 0x4, offset = 0x4, fixed_abs, tag = 'smem constant byte address 0x4 - core index']
  #allocation1 [shape = 'u32[72,128]{1,0:T(1,128)}', space=vmem, size = 0x9000, scoped, tag = 'internal scratch']
  #allocation2 [shape = 'f32[128,128]{1,0:T(8,128)}', space=vmem, size = 0x10000, scoped, tag = 'scratch operand']
  %s0 = inlined_call_operand.vmem [shape: bf16[2,16,18,4], index: 0, kind: input, shape index: {}]
  %s1 = inlined_call_operand.vmem [shape: bf16[2,16,18,4], index: 1, kind: input, shape index: {}]
  %s2 = inlined_call_operand.vmem [shape: bf16[2,16,18,4], index: 2, kind: input, shape index: {}]
  %s3 = inlined_call_operand.vmem [shape: bf16[9,4,128], index: 3, kind: input, shape index: {}]
  %s4 = inlined_call_operand.vmem [shape: f32[1,128], index: 4, kind: input, shape index: {}]
  %s5 = inlined_call_operand.hbm [shape: f32[2,256,128], index: 5, kind: output, shape index: {0}]
  %s6 = inlined_call_operand.hbm [shape: f32[2,1,128], index: 6, kind: output, shape index: {1}]
  %s7 = inlined_call_operand.hbm [shape: f32[2,1,128], index: 7, kind: output, shape index: {2}]
  %8 = xla_tuple %s5, %s6, %s7
  %s9 = sld [smem:[#allocation0]]
  $region73: #{tpu_custom_call.1} parent=0
    _
  %s11 = ssub.s32 1, %s9
  %s12 = scalar_select 0, %s11, %s9
  $region1: #{tpu_custom_call.1} parent=0
    #allocation3 [shape = 'u8[131072]{0}', space=vmem, size = 0x20000, scoped, tag = 'output window, operand 0']
    #allocation4 [shape = 's32[2]{0}', space=sflag, size = 0x8, scoped, tag = 'scoped memory for tpu_custom_call.1']
    #allocation5 [shape = 'u8[1024]{0}', space=vmem, size = 0x400, scoped, tag = 'output window, operand 1']
    #allocation6 [shape = 's32[2]{0}', space=sflag, size = 0x8, scoped, tag = 'scoped memory for tpu_custom_call.1']
    #allocation7 [shape = 'u8[1024]{0}', space=vmem, size = 0x400, scoped, tag = 'output window, operand 2']
    %13 = vsyncpa [#allocation4], 0
    %s14 = scalar_lea.sflag [#allocation4], 1
    %15 = vsyncpa %s14, 0
    %16 = vsyncpa [#allocation6], 0
    %s17 = scalar_lea.sflag [#allocation6], 1
    %18 = vsyncpa %s17, 0
    loop: start=0, step=1, limit=6
    $region2: #{tpu_custom_call.1} parent=1 // loop_pre_header
      _
    $region3: #{tpu_custom_call.1} parent=1 // loop_header
      %s20 = sphi 0, %s24
      %p21 = scmp.ge.s32.totalorder %s20, 6
      %s27 = sphi 0, %s39
      %s28 = sphi 0, %s35
      %s29 = sphi 0, %s27
      %s30 = sphi 0, %s28
      %s31 = sphi 0, %s29
      %s32 = sphi 0, %s30
      %s44 = sphi 0, %s46
      %s47 = sphi 0, %s44
      %s48 = sphi 0, %s47
      %s64 = sphi 0, %s48
      %s72 = sphi 0, %s74
      %s75 = sphi 0, %s72
      %s76 = sphi 0, %s75
      %s92 = sphi 0, %s76
      %s100 = sphi 0, %s102
      %s103 = sphi 0, %s100
      %s104 = sphi 0, %s103
      %s120 = sphi 0, %s104
      %s124 = sphi 0, %s124
      %s126 = sphi 0, %s124
      %s127 = sphi 0, %s126
      %s141 = sphi 0, %s127
      %s145 = sphi 0, %s145
      %s147 = sphi 0, %s145
      %s148 = sphi 0, %s147
      %s162 = sphi 0, %s148
      %s170 = sphi 0, %s172
      %s173 = sphi 0, %s170
      %s174 = sphi 0, %s173
      %s190 = sphi 0, %s174
      %s196 = sphi 0, %s198
      %s199 = sphi 0, %s196
      %s200 = sphi 0, %s199
      %s216 = sphi 0, %s200
      %s222 = sphi 0, %s224
      %s225 = sphi 0, %s222
      %s226 = sphi 0, %s225
      %s242 = sphi 0, %s226
    $region4: #{tpu_custom_call.1} parent=1 // loop_header_branch
      %23 = sbr.rel (%p21) target = $region8
    $region5: #{tpu_custom_call.1} parent=1 // loop_body
      %s25 = ssub.s32 %s20, 1
      %s26 = ssub.s32 %s20, 2
      %s33 = sadd.s32 1, %s28
      %p34 = scmp.ge.s32.totalorder %s33, 2
      %s35 = scalar_select %p34, 0, %s33
      %s36 = sadd.s32 1, %s27
      %s37 = scalar_select %p34, %s36, %s27
      %p38 = scmp.ge.s32.totalorder %s37, 2
      %s39 = scalar_select %p38, 0, %s37
      %s40 = ssub.s32 %s27, %s39
      %s41 = ssub.s32 %s28, %s35
      %s42 = sor.u32 %s40, %s41
      %p43 = scmp.eq.s32.totalorder %s42, 0
      %s45 = sadd.s32 %s44, 1
      %s46 = scalar_select %p43, %s44, %s45
      %p49 = pneg %p43
      %p50 = scmp.eq.s32.totalorder %s20, 3
      %p51 = por %p49, %p50
      %p52 = scmp.ne.s32.totalorder %s44, %s47
      %p53 = scmp.eq.s32.totalorder %s20, 0
      %p54 = por %p52, %p53
      %p55 = scmp.ne.s32.totalorder %s44, %s47
      %p56 = scmp.eq.s32.totalorder %s25, 3
      %p57 = por %p55, %p56
      %p58 = scmp.ne.s32.totalorder %s47, %s48
      %p59 = scmp.eq.s32.totalorder %s25, 0
      %p60 = por %p58, %p59
      %p61 = scmp.ne.s32.totalorder %s47, %s48
      %p62 = scmp.eq.s32.totalorder %s26, 3
      %p63 = por %p61, %p62
      %p65 = scmp.ne.s32.totalorder %s48, %s64
      %p66 = scmp.eq.s32.totalorder %s26, 0
      %p67 = por %p65, %p66
      %s68 = ssub.s32 %s27, %s39
      %s69 = ssub.s32 %s28, %s35
      %s70 = sor.u32 %s68, %s69
      %p71 = scmp.eq.s32.totalorder %s70, 0
      %s73 = sadd.s32 %s72, 1
      %s74 = scalar_select %p71, %s72, %s73
      %p77 = pneg %p71
      %p78 = scmp.eq.s32.totalorder %s20, 3
      %p79 = por %p77, %p78
      %p80 = scmp.ne.s32.totalorder %s72, %s75
      %p81 = scmp.eq.s32.totalorder %s20, 0
      %p82 = por %p80, %p81
      %p83 = scmp.ne.s32.totalorder %s72, %s75
      %p84 = scmp.eq.s32.totalorder %s25, 3
      %p85 = por %p83, %p84
      %p86 = scmp.ne.s32.totalorder %s75, %s76
      %p87 = scmp.eq.s32.totalorder %s25, 0
      %p88 = por %p86, %p87
      %p89 = scmp.ne.s32.totalorder %s75, %s76
      %p90 = scmp.eq.s32.totalorder %s26, 3
      %p91 = por %p89, %p90
      %p93 = scmp.ne.s32.totalorder %s76, %s92
      %p94 = scmp.eq.s32.totalorder %s26, 0
      %p95 = por %p93, %p94
      %s96 = ssub.s32 %s27, %s39
      %s97 = ssub.s32 %s28, %s35
      %s98 = sor.u32 %s96, %s97
      %p99 = scmp.eq.s32.totalorder %s98, 0
      %s101 = sadd.s32 %s100, 1
      %s102 = scalar_select %p99, %s100, %s101
      %p105 = pneg %p99
      %p106 = scmp.eq.s32.totalorder %s20, 3
      %p107 = por %p105, %p106
      %p108 = scmp.ne.s32.totalorder %s100, %s103
      %p109 = scmp.eq.s32.totalorder %s20, 0
      %p110 = por %p108, %p109
      %p111 = scmp.ne.s32.totalorder %s100, %s103
      %p112 = scmp.eq.s32.totalorder %s25, 3
      %p113 = por %p111, %p112
      %p114 = scmp.ne.s32.totalorder %s103, %s104
      %p115 = scmp.eq.s32.totalorder %s25, 0
      %p116 = por %p114, %p115
      %p117 = scmp.ne.s32.totalorder %s103, %s104
      %p118 = scmp.eq.s32.totalorder %s26, 3
      %p119 = por %p117, %p118
      %p121 = scmp.ne.s32.totalorder %s104, %s120
      %p122 = scmp.eq.s32.totalorder %s26, 0
      %p123 = por %p121, %p122
      %s125 = sadd.s32 %s124, 1
      %p128 = scmp.eq.s32.totalorder %s20, 3
      %p129 = scmp.ne.s32.totalorder %s124, %s126
      %p130 = scmp.eq.s32.totalorder %s20, 0
      %p131 = por %p129, %p130
      %p132 = scmp.ne.s32.totalorder %s124, %s126
      %p133 = scmp.eq.s32.totalorder %s25, 3
      %p134 = por %p132, %p133
      %p135 = scmp.ne.s32.totalorder %s126, %s127
      %p136 = scmp.eq.s32.totalorder %s25, 0
      %p137 = por %p135, %p136
      %p138 = scmp.ne.s32.totalorder %s126, %s127
      %p139 = scmp.eq.s32.totalorder %s26, 3
      %p140 = por %p138, %p139
      %p142 = scmp.ne.s32.totalorder %s127, %s141
      %p143 = scmp.eq.s32.totalorder %s26, 0
      %p144 = por %p142, %p143
      %s146 = sadd.s32 %s145, 1
      %p149 = scmp.eq.s32.totalorder %s20, 3
      %p150 = scmp.ne.s32.totalorder %s145, %s147
      %p151 = scmp.eq.s32.totalorder %s20, 0
      %p152 = por %p150, %p151
      %p153 = scmp.ne.s32.totalorder %s145, %s147
      %p154 = scmp.eq.s32.totalorder %s25, 3
      %p155 = por %p153, %p154
      %p156 = scmp.ne.s32.totalorder %s147, %s148
      %p157 = scmp.eq.s32.totalorder %s25, 0
      %p158 = por %p156, %p157
      %p159 = scmp.ne.s32.totalorder %s147, %s148
      %p160 = scmp.eq.s32.totalorder %s26, 3
      %p161 = por %p159, %p160
      %p163 = scmp.ne.s32.totalorder %s148, %s162
      %p164 = scmp.eq.s32.totalorder %s26, 0
      %p165 = por %p163, %p164
      %s166 = ssub.s32 %s27, %s39
      %s167 = ssub.s32 %s28, %s35
      %s168 = sor.u32 %s166, %s167
      %p169 = scmp.eq.s32.totalorder %s168, 0
      %s171 = sadd.s32 %s170, 1
      %s172 = scalar_select %p169, %s170, %s171
      %p175 = pneg %p169
      %p176 = scmp.eq.s32.totalorder %s20, 3
      %p177 = por %p175, %p176
      %p178 = scmp.ne.s32.totalorder %s170, %s173
      %p179 = scmp.eq.s32.totalorder %s20, 0
      %p180 = por %p178, %p179
      %p181 = scmp.ne.s32.totalorder %s170, %s173
      %p182 = scmp.eq.s32.totalorder %s25, 3
      %p183 = por %p181, %p182
      %p184 = scmp.ne.s32.totalorder %s173, %s174
      %p185 = scmp.eq.s32.totalorder %s25, 0
      %p186 = por %p184, %p185
      %p187 = scmp.ne.s32.totalorder %s173, %s174
      %p188 = scmp.eq.s32.totalorder %s26, 3
      %p189 = por %p187, %p188
      %p191 = scmp.ne.s32.totalorder %s174, %s190
      %p192 = scmp.eq.s32.totalorder %s26, 0
      %p193 = por %p191, %p192
      %s194 = ssub.s32 %s27, %s39
      %p195 = scmp.eq.s32.totalorder %s194, 0
      %s197 = sadd.s32 %s196, 1
      %s198 = scalar_select %p195, %s196, %s197
      %p201 = pneg %p195
      %p202 = scmp.eq.s32.totalorder %s20, 3
      %p203 = por %p201, %p202
      %p204 = scmp.ne.s32.totalorder %s196, %s199
      %p205 = scmp.eq.s32.totalorder %s20, 0
      %p206 = por %p204, %p205
      %p207 = scmp.ne.s32.totalorder %s196, %s199
      %p208 = scmp.eq.s32.totalorder %s25, 3
      %p209 = por %p207, %p208
      %p210 = scmp.ne.s32.totalorder %s199, %s200
      %p211 = scmp.eq.s32.totalorder %s25, 0
      %p212 = por %p210, %p211
      %p213 = scmp.ne.s32.totalorder %s199, %s200
      %p214 = scmp.eq.s32.totalorder %s26, 3
      %p215 = por %p213, %p214
      %p217 = scmp.ne.s32.totalorder %s200, %s216
      %p218 = scmp.eq.s32.totalorder %s26, 0
      %p219 = por %p217, %p218
      %s220 = ssub.s32 %s27, %s39
      %p221 = scmp.eq.s32.totalorder %s220, 0
      %s223 = sadd.s32 %s222, 1
      %s224 = scalar_select %p221, %s222, %s223
      %p227 = pneg %p221
      %p228 = scmp.eq.s32.totalorder %s20, 3
      %p229 = por %p227, %p228
      %p230 = scmp.ne.s32.totalorder %s222, %s225
      %p231 = scmp.eq.s32.totalorder %s20, 0
      %p232 = por %p230, %p231
      %p233 = scmp.ne.s32.totalorder %s222, %s225
      %p234 = scmp.eq.s32.totalorder %s25, 3
      %p235 = por %p233, %p234
      %p236 = scmp.ne.s32.totalorder %s225, %s226
      %p237 = scmp.eq.s32.totalorder %s25, 0
      %p238 = por %p236, %p237
      %p239 = scmp.ne.s32.totalorder %s225, %s226
      %p240 = scmp.eq.s32.totalorder %s26, 3
      %p241 = por %p239, %p240
      %p243 = scmp.ne.s32.totalorder %s226, %s242
      %p244 = scmp.eq.s32.totalorder %s26, 0
      %p245 = por %p243, %p244
      %p246 = scmp.le.s32.totalorder 1, %s20
      %p247 = scmp.lt.s32.totalorder %s20, 5
      %p248 = pnand %p246, %p247
      %p249 = pneg %p248
      // Predicated region
      $region9: #{tpu_custom_call.1} parent=5 // pred_check
        _
      $region10: #{tpu_custom_call.1} parent=5 // pred_check_branch
        %251 = sbr.rel (%p248) target = $region12
      $region11: #{tpu_custom_call.1} parent=5 // pred_region
        %s252 = ssub.s32 %s20, 1
        // Predicated region
        $region13: #{tpu_custom_call.1} parent=11 // pred_check
          %p253 = pneg %p137
        $region14: #{tpu_custom_call.1} parent=11 // pred_check_branch
          %255 = sbr.rel (%p253) target = $region16
        $region15: #{tpu_custom_call.1} parent=11 // pred_region
          _
        $region16: #{tpu_custom_call.1} parent=11 // pred_fallthru
          _
        // Predicated region
        $region17: #{tpu_custom_call.1} parent=11 // pred_check
          %p256 = pneg %p158
        $region18: #{tpu_custom_call.1} parent=11 // pred_check_branch
          %258 = sbr.rel (%p256) target = $region20
        $region19: #{tpu_custom_call.1} parent=11 // pred_region
          _
        $region20: #{tpu_custom_call.1} parent=11 // pred_fallthru
          _
      $region12: #{tpu_custom_call.1} parent=5 // pred_fallthru
        _
      %p259 = scmp.lt.s32.totalorder %s20, 4
      // Predicated region
      $region21: #{tpu_custom_call.1} parent=5 // pred_check
        %p260 = pneg %p259
      $region22: #{tpu_custom_call.1} parent=5 // pred_check_branch
        %262 = sbr.rel (%p260) target = $region24
      $region23: #{tpu_custom_call.1} parent=5 // pred_region
        // Predicated region
        $region25: #{tpu_custom_call.1} parent=23 // pred_check
          %p263 = pneg %p54
        $region26: #{tpu_custom_call.1} parent=23 // pred_check_branch
          %265 = sbr.rel (%p263) target = $region28
        $region27: #{tpu_custom_call.1} parent=23 // pred_region
          %s266 = smul.u32 8, %s28
          %p267 = scmp.lt.s32.totalorder %s27, 1
          %s268 = scalar_select %p267, %s27, 1
          %p269 = scmp.lt.s32.totalorder %s266, 15
          %s270 = scalar_select %p269, %s266, 15
          %s271 = smul.addr %s270, 3
          %s272 = smul.addr %s268, 48
          %s273 = sadd.s32 %s271, %s272
          %s274 = smul.addr %s273, 4
          %s275 = scalar_lea.vmem %s0, %s274
          %s276 = smul.u32 8, %s28
        $region28: #{tpu_custom_call.1} parent=23 // pred_fallthru
          _
        // Predicated region
        $region29: #{tpu_custom_call.1} parent=23 // pred_check
          %p277 = pneg %p82
        $region30: #{tpu_custom_call.1} parent=23 // pred_check_branch
          %279 = sbr.rel (%p277) target = $region32
        $region31: #{tpu_custom_call.1} parent=23 // pred_region
          %s280 = smul.u32 8, %s28
          %p281 = scmp.lt.s32.totalorder %s27, 1
          %s282 = scalar_select %p281, %s27, 1
          %p283 = scmp.lt.s32.totalorder %s280, 15
          %s284 = scalar_select %p283, %s280, 15
          %s285 = smul.addr %s284, 3
          %s286 = smul.addr %s282, 48
          %s287 = sadd.s32 %s285, %s286
          %s288 = smul.addr %s287, 4
          %s289 = scalar_lea.vmem %s1, %s288
          %s290 = smul.u32 8, %s28
        $region32: #{tpu_custom_call.1} parent=23 // pred_fallthru
          _
        // Predicated region
        $region33: #{tpu_custom_call.1} parent=23 // pred_check
          %p291 = pneg %p110
        $region34: #{tpu_custom_call.1} parent=23 // pred_check_branch
          %293 = sbr.rel (%p291) target = $region36
        $region35: #{tpu_custom_call.1} parent=23 // pred_region
          %s294 = smul.u32 8, %s28
          %p295 = scmp.lt.s32.totalorder %s27, 1
          %s296 = scalar_select %p295, %s27, 1
          %p297 = scmp.lt.s32.totalorder %s294, 15
          %s298 = scalar_select %p297, %s294, 15
          %s299 = smul.addr %s298, 3
          %s300 = smul.addr %s296, 48
          %s301 = sadd.s32 %s299, %s300
          %s302 = smul.addr %s301, 4
          %s303 = scalar_lea.vmem %s2, %s302
          %s304 = smul.u32 8, %s28
        $region36: #{tpu_custom_call.1} parent=23 // pred_fallthru
          _
      $region24: #{tpu_custom_call.1} parent=5 // pred_fallthru
        _
      %p305 = scmp.le.s32.totalorder 1, %s20
      %p306 = scmp.lt.s32.totalorder %s20, 5
      %p307 = pnand %p305, %p306
      %p308 = pneg %p307
      // Predicated region
      $region37: #{tpu_custom_call.1} parent=5 // pred_check
        _
      $region38: #{tpu_custom_call.1} parent=5 // pred_check_branch
        %310 = sbr.rel (%p307) target = $region40
      $region39: #{tpu_custom_call.1} parent=5 // pred_region
        %s311 = ssub.s32 %s20, 1
        %s312 = smul.u32 8, %s30
        %p313 = scmp.lt.s32.totalorder %s29, 1
        %s314 = scalar_select %p313, %s29, 1
        %p315 = scmp.lt.s32.totalorder %s312, 15
        %s316 = scalar_select %p315, %s312, 15
        %s317 = smul.addr %s316, 3
        %s318 = smul.addr %s314, 48
        %s319 = sadd.s32 %s317, %s318
        %s320 = smul.addr %s319, 4
        %s321 = scalar_lea.vmem %s0, %s320
        %p322 = pneg %p60
        %p323 = pneg %p57
        %s324 = smul.u32 8, %s30
        %p325 = scmp.lt.s32.totalorder %s29, 1
        %s326 = scalar_select %p325, %s29, 1
        %p327 = scmp.lt.s32.totalorder %s324, 15
        %s328 = scalar_select %p327, %s324, 15
        %s329 = smul.addr %s328, 3
        %s330 = smul.addr %s326, 48
        %s331 = sadd.s32 %s329, %s330
        %s332 = smul.addr %s331, 4
        %s333 = scalar_lea.vmem %s1, %s332
        %p334 = pneg %p88
        %p335 = pneg %p85
        %s336 = smul.u32 8, %s30
        %p337 = scmp.lt.s32.totalorder %s29, 1
        %s338 = scalar_select %p337, %s29, 1
        %p339 = scmp.lt.s32.totalorder %s336, 15
        %s340 = scalar_select %p339, %s336, 15
        %s341 = smul.addr %s340, 3
        %s342 = smul.addr %s338, 48
        %s343 = sadd.s32 %s341, %s342
        %s344 = smul.addr %s343, 4
        %s345 = scalar_lea.vmem %s2, %s344
        %p346 = pneg %p116
        %p347 = pneg %p113
        %p348 = pneg %p137
        %p349 = pneg %p134
        %p350 = pneg %p158
        %p351 = pneg %p155
        %p352 = pneg %p186
        %p353 = pneg %p183
        %s354 = sand.u32 %s173, 1
        %s355 = scalar_lea.sflag [#allocation4], %s354
        %s356 = sand.u32 %s173, 1
        %s357 = smul.addr %s356, 128
        %s358 = scalar_lea.vmem [#allocation3], %s357
        %p359 = pneg %p212
        %p360 = pneg %p209
        %s361 = sand.u32 %s25, 1
        %s362 = scalar_lea.sflag [#allocation6], %s361
        %s363 = sand.u32 %s199, 1
        %s364 = scalar_lea.vmem [#allocation5], %s363
        %p365 = pneg %p238
        %p366 = pneg %p235
        %s367 = sand.u32 %s25, 1
        %s368 = scalar_lea.sflag [#allocation6], %s367
        %s369 = sand.u32 %s225, 1
        %s370 = scalar_lea.vmem [#allocation7], %s369
        %s371 = smul.u32 8, %s30
        %p372 = scmp.lt.s32.totalorder %s29, 1
        %s373 = scalar_select %p372, %s29, 1
        %p374 = scmp.lt.s32.totalorder %s371, 15
        %s375 = scalar_select %p374, %s371, 15
        %s376 = smul.addr %s375, 3
        %s377 = smul.addr %s373, 48
        %s378 = sadd.s32 %s376, %s377
        %s379 = smul.addr %s378, 4
        %s380 = scalar_lea.vmem %s0, %s379
        %s381 = smul.u32 8, %s30
        %s382 = smul.u32 8, %s30
        %p383 = scmp.lt.s32.totalorder %s29, 1
        %s384 = scalar_select %p383, %s29, 1
        %p385 = scmp.lt.s32.totalorder %s382, 15
        %s386 = scalar_select %p385, %s382, 15
        %s387 = smul.addr %s386, 3
        %s388 = smul.addr %s384, 48
        %s389 = sadd.s32 %s387, %s388
        %s390 = smul.addr %s389, 4
        %s391 = scalar_lea.vmem %s1, %s390
        %s392 = smul.u32 8, %s30
        %s393 = smul.u32 8, %s30
        %p394 = scmp.lt.s32.totalorder %s29, 1
        %s395 = scalar_select %p394, %s29, 1
        %p396 = scmp.lt.s32.totalorder %s393, 15
        %s397 = scalar_select %p396, %s393, 15
        %s398 = smul.addr %s397, 3
        %s399 = smul.addr %s395, 48
        %s400 = sadd.s32 %s398, %s399
        %s401 = smul.addr %s400, 4
        %s402 = scalar_lea.vmem %s2, %s401
        %s403 = smul.u32 8, %s30
        %s404 = smul.u32 16, %s30
        %406 = vst [vmem:[#allocation2] sm:$0xff] 0.0
        %407 = vst [vmem:[#allocation2 + $0x8] sm:$0xff] 0.0
        %408 = vst [vmem:[#allocation2 + $0x10] sm:$0xff] 0.0
        %409 = vst [vmem:[#allocation2 + $0x18] sm:$0xff] 0.0
        %410 = vst [vmem:[#allocation2 + $0x20] sm:$0xff] 0.0
        %411 = vst [vmem:[#allocation2 + $0x28] sm:$0xff] 0.0
        %412 = vst [vmem:[#allocation2 + $0x30] sm:$0xff] 0.0
        %413 = vst [vmem:[#allocation2 + $0x38] sm:$0xff] 0.0
        %414 = vst [vmem:[#allocation2 + $0x40] sm:$0xff] 0.0
        %415 = vst [vmem:[#allocation2 + $0x48] sm:$0xff] 0.0
        %416 = vst [vmem:[#allocation2 + $0x50] sm:$0xff] 0.0
        %417 = vst [vmem:[#allocation2 + $0x58] sm:$0xff] 0.0
        %418 = vst [vmem:[#allocation2 + $0x60] sm:$0xff] 0.0
        %419 = vst [vmem:[#allocation2 + $0x68] sm:$0xff] 0.0
        %420 = vst [vmem:[#allocation2 + $0x70] sm:$0xff] 0.0
        %421 = vst [vmem:[#allocation2 + $0x78] sm:$0xff] 0.0
        %v422 = vld [vmem:[%s380] sm:$0xf]
        %v423 = vld [vmem:[%s380 + $0x4] sm:$0xf]
        %v424 = vld [vmem:[%s380 + $0x8] sm:$0x1]
        %v425 = vld [vmem:[%s380 + $0xc] sm:$0xf]
        %v426 = vld [vmem:[%s380 + $0x10] sm:$0xf]
        %v427 = vld [vmem:[%s380 + $0x14] sm:$0x1]
        %v428 = vld [vmem:[%s380 + $0x18] sm:$0xf]
        %v429 = vld [vmem:[%s380 + $0x1c] sm:$0xf]
        %v430 = vld [vmem:[%s380 + $0x20] sm:$0x1]
        %v431 = vld [vmem:[%s380 + $0x24] sm:$0xf]
        %v432 = vld [vmem:[%s380 + $0x28] sm:$0xf]
        %v433 = vld [vmem:[%s380 + $0x2c] sm:$0x1]
        %v434 = vld [vmem:[%s380 + $0x30] sm:$0xf]
        %v435 = vld [vmem:[%s380 + $0x34] sm:$0xf]
        %v436 = vld [vmem:[%s380 + $0x38] sm:$0x1]
        %v437 = vld [vmem:[%s380 + $0x3c] sm:$0xf]
        %v438 = vld [vmem:[%s380 + $0x40] sm:$0xf]
        %v439 = vld [vmem:[%s380 + $0x44] sm:$0x1]
        %v440 = vld [vmem:[%s380 + $0x48] sm:$0xf]
        %v441 = vld [vmem:[%s380 + $0x4c] sm:$0xf]
        %v442 = vld [vmem:[%s380 + $0x50] sm:$0x1]
        %v443 = vld [vmem:[%s380 + $0x54] sm:$0xf]
        %v444 = vld [vmem:[%s380 + $0x58] sm:$0xf]
        %v445 = vld [vmem:[%s380 + $0x5c] sm:$0x1]
        %v446 = vld [vmem:[#allocation2] sm:$0xff]
        %v447 = vld [vmem:[#allocation2 + $0x8] sm:$0xff]
        %v448 = vld [vmem:[#allocation2 + $0x10] sm:$0xff]
        %v449 = vld [vmem:[#allocation2 + $0x18] sm:$0xff]
        %v450 = vld [vmem:[#allocation2 + $0x20] sm:$0xff]
        %v451 = vld [vmem:[#allocation2 + $0x28] sm:$0xff]
        %v452 = vld [vmem:[#allocation2 + $0x30] sm:$0xff]
        %v453 = vld [vmem:[#allocation2 + $0x38] sm:$0xff]
        %v454 = vld [vmem:[#allocation2 + $0x40] sm:$0xff]
        %v455 = vld [vmem:[#allocation2 + $0x48] sm:$0xff]
        %v456 = vld [vmem:[#allocation2 + $0x50] sm:$0xff]
        %v457 = vld [vmem:[#allocation2 + $0x58] sm:$0xff]
        %v458 = vld [vmem:[#allocation2 + $0x60] sm:$0xff]
        %v459 = vld [vmem:[#allocation2 + $0x68] sm:$0xff]
        %v460 = vld [vmem:[#allocation2 + $0x70] sm:$0xff]
        %v461 = vld [vmem:[#allocation2 + $0x78] sm:$0xff]
        %v462 = vld [vmem:[%s3] sm:$0x3]
        %v479 = vunpack.c.l.b16 %v422
        %v480 = vunpack.c.l.b16 %v423
        %v481 = vunpack.c.l.b16 %v425
        %v482 = vunpack.c.l.b16 %v426
        %v483 = vunpack.c.l.b16 %v428
        %v484 = vunpack.c.l.b16 %v429
        %v485 = vunpack.c.l.b16 %v431
        %v486 = vunpack.c.l.b16 %v432
        %v487 = vunpack.c.l.b16 %v434
        %v488 = vunpack.c.l.b16 %v435
        %v489 = vunpack.c.l.b16 %v437
        %v490 = vunpack.c.l.b16 %v438
        %v491 = vunpack.c.l.b16 %v440
        %v492 = vunpack.c.l.b16 %v441
        %v493 = vunpack.c.l.b16 %v443
        %v494 = vunpack.c.l.b16 %v444
        %v495 = vpack.c.b16 %v480, %v479
        %v496 = vpack.c.b16 %v482, %v481
        %v497 = vpack.c.b16 %v484, %v483
        %v498 = vpack.c.b16 %v486, %v485
        %v499 = vpack.c.b16 %v488, %v487
        %v500 = vpack.c.b16 %v490, %v489
        %v501 = vpack.c.b16 %v492, %v491
        %v502 = vpack.c.b16 %v494, %v493
        %vm503 = vcmask 31744
        %v505 = vsel %vm503, %v495, 0
        %v508 = vsel %vm503, %v496, 0
        %v511 = vsel %vm503, %v497, 0
        %v514 = vsel %vm503, %v498, 0
        %v517 = vsel %vm503, %v499, 0
        %v520 = vsel %vm503, %v500, 0
        %v523 = vsel %vm503, %v501, 0
        %v526 = vsel %vm503, %v502, 0
        %vm528 = vcmask 1041408
        %v530 = vsel %vm528, %v462, 0
        %532 = vmatpush.bf16.msra.mxu0 0
        %533 = vmatpush.bf16.msra.mxu0 0
        %534 = vmatpush.bf16.msra.mxu0 0
        %535 = vmatpush.bf16.msra.mxu0 0
        %536 = vmatpush.bf16.msra.mxu0 0
        %537 = vmatpush.bf16.msra.mxu0 0
        %538 = vmatpush.bf16.msra.mxu0 0
        %539 = vmatpush.bf16.msra.mxu0 %v530
        %540 = vmatmul.bf16.gmra.mxu0 %v505
        %v541 = vpop.f32.mrf.mxu0
        %v542 = vadd.f32 0.0, %v541
        %v543 = vpop.f32.mrf.mxu0
        %v544 = vadd.f32 0.0, %v543
        %545 = vmatmul.bf16.gmra.mxu0 %v508
        %v546 = vpop.f32.mrf.mxu0
        %v547 = vadd.f32 0.0, %v546
        %v548 = vpop.f32.mrf.mxu0
        %v549 = vadd.f32 0.0, %v548
        %550 = vmatmul.bf16.gmra.mxu0 %v511
        %v551 = vpop.f32.mrf.mxu0
        %v552 = vadd.f32 0.0, %v551
        %v553 = vpop.f32.mrf.mxu0
        %v554 = vadd.f32 0.0, %v553
        %555 = vmatmul.bf16.gmra.mxu0 %v514
        %v556 = vpop.f32.mrf.mxu0
        %v557 = vadd.f32 0.0, %v556
        %v558 = vpop.f32.mrf.mxu0
        %v559 = vadd.f32 0.0, %v558
        %560 = vmatmul.bf16.gmra.mxu0 %v517
        %v561 = vpop.f32.mrf.mxu0
        %v562 = vadd.f32 0.0, %v561
        %v563 = vpop.f32.mrf.mxu0
        %v564 = vadd.f32 0.0, %v563
        %565 = vmatmul.bf16.gmra.mxu0 %v520
        %v566 = vpop.f32.mrf.mxu0
        %v567 = vadd.f32 0.0, %v566
        %v568 = vpop.f32.mrf.mxu0
        %v569 = vadd.f32 0.0, %v568
        %570 = vmatmul.bf16.gmra.mxu0 %v523
        %v571 = vpop.f32.mrf.mxu0
        %v572 = vadd.f32 0.0, %v571
        %v573 = vpop.f32.mrf.mxu0
        %v574 = vadd.f32 0.0, %v573
        %575 = vmatmul.bf16.gmra.mxu0 %v526
        %v576 = vpop.f32.mrf.mxu0
        %v577 = vadd.f32 0.0, %v576
        %v578 = vpop.f32.mrf.mxu0
        %v579 = vadd.f32 0.0, %v578
        %580 = vdwg.mxu0
        %v581 = vadd.f32 %v446, %v542
        %v582 = vadd.f32 %v447, %v544
        %v583 = vadd.f32 %v448, %v547
        %v584 = vadd.f32 %v449, %v549
        %v585 = vadd.f32 %v450, %v552
        %v586 = vadd.f32 %v451, %v554
        %v587 = vadd.f32 %v452, %v557
        %v588 = vadd.f32 %v453, %v559
        %v589 = vadd.f32 %v454, %v562
        %v590 = vadd.f32 %v455, %v564
        %v591 = vadd.f32 %v456, %v567
        %v592 = vadd.f32 %v457, %v569
        %v593 = vadd.f32 %v458, %v572
        %v594 = vadd.f32 %v459, %v574
        %v595 = vadd.f32 %v460, %v577
        %v596 = vadd.f32 %v461, %v579
        %597 = vst [vmem:[#allocation2] sm:$0xff] %v581
        %598 = vst [vmem:[#allocation2 + $0x8] sm:$0xff] %v582
        %599 = vst [vmem:[#allocation2 + $0x10] sm:$0xff] %v583
        %600 = vst [vmem:[#allocation2 + $0x18] sm:$0xff] %v584
        %601 = vst [vmem:[#allocation2 + $0x20] sm:$0xff] %v585
        %602 = vst [vmem:[#allocation2 + $0x28] sm:$0xff] %v586
        %603 = vst [vmem:[#allocation2 + $0x30] sm:$0xff] %v587
        %604 = vst [vmem:[#allocation2 + $0x38] sm:$0xff] %v588
        %605 = vst [vmem:[#allocation2 + $0x40] sm:$0xff] %v589
        %606 = vst [vmem:[#allocation2 + $0x48] sm:$0xff] %v590
        %607 = vst [vmem:[#allocation2 + $0x50] sm:$0xff] %v591
        %608 = vst [vmem:[#allocation2 + $0x58] sm:$0xff] %v592
        %609 = vst [vmem:[#allocation2 + $0x60] sm:$0xff] %v593
        %610 = vst [vmem:[#allocation2 + $0x68] sm:$0xff] %v594
        %611 = vst [vmem:[#allocation2 + $0x70] sm:$0xff] %v595
        %612 = vst [vmem:[#allocation2 + $0x78] sm:$0xff] %v596
        %vm613 = vsmask.f32 3328
        %vm614 = vsmask.f32 7440
        %vm615 = vmor %vm613, %vm614
        %v617 = vshrl.u32 %v422, 16
        %v619 = vrot.slane %v617, 4
        %v620 = vshll.u32 %v422, 16
        %v622 = vrot.slane %v620, 5
        %v623 = vor.u32 %v619, %v622
        %v624 = vrot.slane %v623, 4
        %v626 = vshll.u32 %v423, 16
        %v628 = vrot.slane %v626, 5
        %v629 = vsel %vm615, %v624, %v628
        %v630 = vshrl.u32 %v423, 16
        %v632 = vrot.slane %v630, 4
        %v633 = vor.u32 %v632, %v628
        %v634 = vrot.slane %v633, 4
        %v636 = vshll.u32 %v424, 16
        %v638 = vrot.slane %v636, 5
        %v639 = vsel %vm615, %v634, %v638
        %v641 = vshrl.u32 %v425, 16
        %v643 = vrot.slane %v641, 4
        %v644 = vshll.u32 %v425, 16
        %v646 = vrot.slane %v644, 5
        %v647 = vor.u32 %v643, %v646
        %v648 = vrot.slane %v647, 4
        %v650 = vshll.u32 %v426, 16
        %v652 = vrot.slane %v650, 5
        %v653 = vsel %vm615, %v648, %v652
        %v654 = vshrl.u32 %v426, 16
        %v656 = vrot.slane %v654, 4
        %v657 = vor.u32 %v656, %v652
        %v658 = vrot.slane %v657, 4
        %v660 = vshll.u32 %v427, 16
        %v662 = vrot.slane %v660, 5
        %v663 = vsel %vm615, %v658, %v662
        %v665 = vshrl.u32 %v428, 16
        %v667 = vrot.slane %v665, 4
        %v668 = vshll.u32 %v428, 16
        %v670 = vrot.slane %v668, 5
        %v671 = vor.u32 %v667, %v670
        %v672 = vrot.slane %v671, 4
        %v674 = vshll.u32 %v429, 16
        %v676 = vrot.slane %v674, 5
        %v677 = vsel %vm615, %v672, %v676
        %v678 = vshrl.u32 %v429, 16
        %v680 = vrot.slane %v678, 4
        %v681 = vor.u32 %v680, %v676
        %v682 = vrot.slane %v681, 4
        %v684 = vshll.u32 %v430, 16
        %v686 = vrot.slane %v684, 5
        %v687 = vsel %vm615, %v682, %v686
        %v689 = vshrl.u32 %v431, 16
        %v691 = vrot.slane %v689, 4
        %v692 = vshll.u32 %v431, 16
        %v694 = vrot.slane %v692, 5
        %v695 = vor.u32 %v691, %v694
        %v696 = vrot.slane %v695, 4
        %v698 = vshll.u32 %v432, 16
        %v700 = vrot.slane %v698, 5
        %v701 = vsel %vm615, %v696, %v700
        %v702 = vshrl.u32 %v432, 16
        %v704 = vrot.slane %v702, 4
        %v705 = vor.u32 %v704, %v700
        %v706 = vrot.slane %v705, 4
        %v708 = vshll.u32 %v433, 16
        %v710 = vrot.slane %v708, 5
        %v711 = vsel %vm615, %v706, %v710
        %v713 = vshrl.u32 %v434, 16
        %v715 = vrot.slane %v713, 4
        %v716 = vshll.u32 %v434, 16
        %v718 = vrot.slane %v716, 5
        %v719 = vor.u32 %v715, %v718
        %v720 = vrot.slane %v719, 4
        %v722 = vshll.u32 %v435, 16
        %v724 = vrot.slane %v722, 5
        %v725 = vsel %vm615, %v720, %v724
        %v726 = vshrl.u32 %v435, 16
        %v728 = vrot.slane %v726, 4
        %v729 = vor.u32 %v728, %v724
        %v730 = vrot.slane %v729, 4
        %v732 = vshll.u32 %v436, 16
        %v734 = vrot.slane %v732, 5
        %v735 = vsel %vm615, %v730, %v734
        %v737 = vshrl.u32 %v437, 16
        %v739 = vrot.slane %v737, 4
        %v740 = vshll.u32 %v437, 16
        %v742 = vrot.slane %v740, 5
        %v743 = vor.u32 %v739, %v742
        %v744 = vrot.slane %v743, 4
        %v746 = vshll.u32 %v438, 16
        %v748 = vrot.slane %v746, 5
        %v749 = vsel %vm615, %v744, %v748
        %v750 = vshrl.u32 %v438, 16
        %v752 = vrot.slane %v750, 4
        %v753 = vor.u32 %v752, %v748
        %v754 = vrot.slane %v753, 4
        %v756 = vshll.u32 %v439, 16
        %v758 = vrot.slane %v756, 5
        %v759 = vsel %vm615, %v754, %v758
        %v761 = vshrl.u32 %v440, 16
        %v763 = vrot.slane %v761, 4
        %v764 = vshll.u32 %v440, 16
        %v766 = vrot.slane %v764, 5
        %v767 = vor.u32 %v763, %v766
        %v768 = vrot.slane %v767, 4
        %v770 = vshll.u32 %v441, 16
        %v772 = vrot.slane %v770, 5
        %v773 = vsel %vm615, %v768, %v772
        %v774 = vshrl.u32 %v441, 16
        %v776 = vrot.slane %v774, 4
        %v777 = vor.u32 %v776, %v772
        %v778 = vrot.slane %v777, 4
        %v780 = vshll.u32 %v442, 16
        %v782 = vrot.slane %v780, 5
        %v783 = vsel %vm615, %v778, %v782
        %v785 = vshrl.u32 %v443, 16
        %v787 = vrot.slane %v785, 4
        %v788 = vshll.u32 %v443, 16
        %v790 = vrot.slane %v788, 5
        %v791 = vor.u32 %v787, %v790
        %v792 = vrot.slane %v791, 4
        %v794 = vshll.u32 %v444, 16
        %v796 = vrot.slane %v794, 5
        %v797 = vsel %vm615, %v792, %v796
        %v798 = vshrl.u32 %v444, 16
        %v800 = vrot.slane %v798, 4
        %v801 = vor.u32 %v800, %v796
        %v802 = vrot.slane %v801, 4
        %v804 = vshll.u32 %v445, 16
        %v806 = vrot.slane %v804, 5
        %v807 = vsel %vm615, %v802, %v806
        %v808 = vld [vmem:[#allocation2] sm:$0xff]
        %v809 = vld [vmem:[#allocation2 + $0x8] sm:$0xff]
        %v810 = vld [vmem:[#allocation2 + $0x10] sm:$0xff]
        %v811 = vld [vmem:[#allocation2 + $0x18] sm:$0xff]
        %v812 = vld [vmem:[#allocation2 + $0x20] sm:$0xff]
        %v813 = vld [vmem:[#allocation2 + $0x28] sm:$0xff]
        %v814 = vld [vmem:[#allocation2 + $0x30] sm:$0xff]
        %v815 = vld [vmem:[#allocation2 + $0x38] sm:$0xff]
        %v816 = vld [vmem:[#allocation2 + $0x40] sm:$0xff]
        %v817 = vld [vmem:[#allocation2 + $0x48] sm:$0xff]
        %v818 = vld [vmem:[#allocation2 + $0x50] sm:$0xff]
        %v819 = vld [vmem:[#allocation2 + $0x58] sm:$0xff]
        %v820 = vld [vmem:[#allocation2 + $0x60] sm:$0xff]
        %v821 = vld [vmem:[#allocation2 + $0x68] sm:$0xff]
        %v822 = vld [vmem:[#allocation2 + $0x70] sm:$0xff]
        %v823 = vld [vmem:[#allocation2 + $0x78] sm:$0xff]
        %s824 = scalar_lea.vmem %s3, 2
        %v825 = vld [vmem:[%s824] sm:$0x3]
        %v826 = vunpack.c.l.b16 %v629
        %v827 = vunpack.c.l.b16 %v639
        %v828 = vunpack.c.l.b16 %v653
        %v829 = vunpack.c.l.b16 %v663
        %v830 = vunpack.c.l.b16 %v677
        %v831 = vunpack.c.l.b16 %v687
        %v832 = vunpack.c.l.b16 %v701
        %v833 = vunpack.c.l.b16 %v711
        %v834 = vunpack.c.l.b16 %v725
        %v835 = vunpack.c.l.b16 %v735
        %v836 = vunpack.c.l.b16 %v749
        %v837 = vunpack.c.l.b16 %v759
        %v838 = vunpack.c.l.b16 %v773
        %v839 = vunpack.c.l.b16 %v783
        %v840 = vunpack.c.l.b16 %v797
        %v841 = vunpack.c.l.b16 %v807
        %v842 = vpack.c.b16 %v827, %v826
        %v843 = vpack.c.b16 %v829, %v828
        %v844 = vpack.c.b16 %v831, %v830
        %v845 = vpack.c.b16 %v833, %v832
        %v846 = vpack.c.b16 %v835, %v834
        %v847 = vpack.c.b16 %v837, %v836
        %v848 = vpack.c.b16 %v839, %v838
        %v849 = vpack.c.b16 %v841, %v840
        %v851 = vsel %vm503, %v842, 0
        %v854 = vsel %vm503, %v843, 0
        %v857 = vsel %vm503, %v844, 0
        %v860 = vsel %vm503, %v845, 0
        %v863 = vsel %vm503, %v846, 0
        %v866 = vsel %vm503, %v847, 0
        %v869 = vsel %vm503, %v848, 0
        %v872 = vsel %vm503, %v849, 0
        %v875 = vsel %vm528, %v825, 0
        %877 = vmatpush.bf16.msra.mxu0 0
        %878 = vmatpush.bf16.msra.mxu0 0
        %879 = vmatpush.bf16.msra.mxu0 0
        %880 = vmatpush.bf16.msra.mxu0 0
        %881 = vmatpush.bf16.msra.mxu0 0
        %882 = vmatpush.bf16.msra.mxu0 0
        %883 = vmatpush.bf16.msra.mxu0 0
        %884 = vmatpush.bf16.msra.mxu0 %v875
        %885 = vmatmul.bf16.gmra.mxu0 %v851
        %v886 = vpop.f32.mrf.mxu0
        %v887 = vadd.f32 0.0, %v886
        %v888 = vpop.f32.mrf.mxu0
        %v889 = vadd.f32 0.0, %v888
        %890 = vmatmul.bf16.gmra.mxu0 %v854
        %v891 = vpop.f32.mrf.mxu0
        %v892 = vadd.f32 0.0, %v891
        %v893 = vpop.f32.mrf.mxu0
        %v894 = vadd.f32 0.0, %v893
        %895 = vmatmul.bf16.gmra.mxu0 %v857
        %v896 = vpop.f32.mrf.mxu0
        %v897 = vadd.f32 0.0, %v896
        %v898 = vpop.f32.mrf.mxu0
        %v899 = vadd.f32 0.0, %v898
        %900 = vmatmul.bf16.gmra.mxu0 %v860
        %v901 = vpop.f32.mrf.mxu0
        %v902 = vadd.f32 0.0, %v901
        %v903 = vpop.f32.mrf.mxu0
        %v904 = vadd.f32 0.0, %v903
        %905 = vmatmul.bf16.gmra.mxu0 %v863
        %v906 = vpop.f32.mrf.mxu0
        %v907 = vadd.f32 0.0, %v906
        %v908 = vpop.f32.mrf.mxu0
        %v909 = vadd.f32 0.0, %v908
        %910 = vmatmul.bf16.gmra.mxu0 %v866
        %v911 = vpop.f32.mrf.mxu0
        %v912 = vadd.f32 0.0, %v911
        %v913 = vpop.f32.mrf.mxu0
        %v914 = vadd.f32 0.0, %v913
        %915 = vmatmul.bf16.gmra.mxu0 %v869
        %v916 = vpop.f32.mrf.mxu0
        %v917 = vadd.f32 0.0, %v916
        %v918 = vpop.f32.mrf.mxu0
        %v919 = vadd.f32 0.0, %v918
        %920 = vmatmul.bf16.gmra.mxu0 %v872
        %v921 = vpop.f32.mrf.mxu0
        %v922 = vadd.f32 0.0, %v921
        %v923 = vpop.f32.mrf.mxu0
        %v924 = vadd.f32 0.0, %v923
        %925 = vdwg.mxu0
        %v926 = vadd.f32 %v808, %v887
        %v927 = vadd.f32 %v809, %v889
        %v928 = vadd.f32 %v810, %v892
        %v929 = vadd.f32 %v811, %v894
        %v930 = vadd.f32 %v812, %v897
        %v931 = vadd.f32 %v813, %v899
        %v932 = vadd.f32 %v814, %v902
        %v933 = vadd.f32 %v815, %v904
        %v934 = vadd.f32 %v816, %v907
        %v935 = vadd.f32 %v817, %v909
        %v936 = vadd.f32 %v818, %v912
        %v937 = vadd.f32 %v819, %v914
        %v938 = vadd.f32 %v820, %v917
        %v939 = vadd.f32 %v821, %v919
        %v940 = vadd.f32 %v822, %v922
        %v941 = vadd.f32 %v823, %v924
        %942 = vst [vmem:[#allocation2] sm:$0xff] %v926
        %943 = vst [vmem:[#allocation2 + $0x8] sm:$0xff] %v927
        %944 = vst [vmem:[#allocation2 + $0x10] sm:$0xff] %v928
        %945 = vst [vmem:[#allocation2 + $0x18] sm:$0xff] %v929
        %946 = vst [vmem:[#allocation2 + $0x20] sm:$0xff] %v930
        %947 = vst [vmem:[#allocation2 + $0x28] sm:$0xff] %v931
        %948 = vst [vmem:[#allocation2 + $0x30] sm:$0xff] %v932
        %949 = vst [vmem:[#allocation2 + $0x38] sm:$0xff] %v933
        %950 = vst [vmem:[#allocation2 + $0x40] sm:$0xff] %v934
        %951 = vst [vmem:[#allocation2 + $0x48] sm:$0xff] %v935
        %952 = vst [vmem:[#allocation2 + $0x50] sm:$0xff] %v936
        %953 = vst [vmem:[#allocation2 + $0x58] sm:$0xff] %v937
        %954 = vst [vmem:[#allocation2 + $0x60] sm:$0xff] %v938
        %955 = vst [vmem:[#allocation2 + $0x68] sm:$0xff] %v939
        %956 = vst [vmem:[#allocation2 + $0x70] sm:$0xff] %v940
        %957 = vst [vmem:[#allocation2 + $0x78] sm:$0xff] %v941
        %vm966 = vcmask 1042432
        %vm967 = vcmask 1046532
        %vm968 = vmor %vm966, %vm967
        %v969 = vrot.slane %v422, 5
        %v970 = vrot.slane %v969, 4
        %v971 = vrot.slane %v423, 5
        %v972 = vsel %vm968, %v970, %v971
        %v973 = vrot.slane %v971, 4
        %v974 = vrot.slane %v424, 5
        %v975 = vsel %vm968, %v973, %v974
        %v976 = vrot.slane %v425, 5
        %v977 = vrot.slane %v976, 4
        %v978 = vrot.slane %v426, 5
        %v979 = vsel %vm968, %v977, %v978
        %v980 = vrot.slane %v978, 4
        %v981 = vrot.slane %v427, 5
        %v982 = vsel %vm968, %v980, %v981
        %v983 = vrot.slane %v428, 5
        %v984 = vrot.slane %v983, 4
        %v985 = vrot.slane %v429, 5
        %v986 = vsel %vm968, %v984, %v985
        %v987 = vrot.slane %v985, 4
        %v988 = vrot.slane %v430, 5
        %v989 = vsel %vm968, %v987, %v988
        %v990 = vrot.slane %v431, 5
        %v991 = vrot.slane %v990, 4
        %v992 = vrot.slane %v432, 5
        %v993 = vsel %vm968, %v991, %v992
        %v994 = vrot.slane %v992, 4
        %v995 = vrot.slane %v433, 5
        %v996 = vsel %vm968, %v994, %v995
        %v997 = vrot.slane %v434, 5
        %v998 = vrot.slane %v997, 4
        %v999 = vrot.slane %v435, 5
        %v1000 = vsel %vm968, %v998, %v999
        %v1001 = vrot.slane %v999, 4
        %v1002 = vrot.slane %v436, 5
        %v1003 = vsel %vm968, %v1001, %v1002
        %v1004 = vrot.slane %v437, 5
        %v1005 = vrot.slane %v1004, 4
        %v1006 = vrot.slane %v438, 5
        %v1007 = vsel %vm968, %v1005, %v1006
        %v1008 = vrot.slane %v1006, 4
        %v1009 = vrot.slane %v439, 5
        %v1010 = vsel %vm968, %v1008, %v1009
        %v1011 = vrot.slane %v440, 5
        %v1012 = vrot.slane %v1011, 4
        %v1013 = vrot.slane %v441, 5
        %v1014 = vsel %vm968, %v1012, %v1013
        %v1015 = vrot.slane %v1013, 4
        %v1016 = vrot.slane %v442, 5
        %v1017 = vsel %vm968, %v1015, %v1016
        %v1018 = vrot.slane %v443, 5
        %v1019 = vrot.slane %v1018, 4
        %v1020 = vrot.slane %v444, 5
        %v1021 = vsel %vm968, %v1019, %v1020
        %v1022 = vrot.slane %v1020, 4
        %v1023 = vrot.slane %v445, 5
        %v1024 = vsel %vm968, %v1022, %v1023
        %v1025 = vld [vmem:[#allocation2] sm:$0xff]
        %v1026 = vld [vmem:[#allocation2 + $0x8] sm:$0xff]
        %v1027 = vld [vmem:[#allocation2 + $0x10] sm:$0xff]
        %v1028 = vld [vmem:[#allocation2 + $0x18] sm:$0xff]
        %v1029 = vld [vmem:[#allocation2 + $0x20] sm:$0xff]
        %v1030 = vld [vmem:[#allocation2 + $0x28] sm:$0xff]
        %v1031 = vld [vmem:[#allocation2 + $0x30] sm:$0xff]
        %v1032 = vld [vmem:[#allocation2 + $0x38] sm:$0xff]
        %v1033 = vld [vmem:[#allocation2 + $0x40] sm:$0xff]
        %v1034 = vld [vmem:[#allocation2 + $0x48] sm:$0xff]
        %v1035 = vld [vmem:[#allocation2 + $0x50] sm:$0xff]
        %v1036 = vld [vmem:[#allocation2 + $0x58] sm:$0xff]
        %v1037 = vld [vmem:[#allocation2 + $0x60] sm:$0xff]
        %v1038 = vld [vmem:[#allocation2 + $0x68] sm:$0xff]
        %v1039 = vld [vmem:[#allocation2 + $0x70] sm:$0xff]
        %v1040 = vld [vmem:[#allocation2 + $0x78] sm:$0xff]
        %s1041 = scalar_lea.vmem %s3, 4
        %v1042 = vld [vmem:[%s1041] sm:$0x3]
        %v1043 = vunpack.c.l.b16 %v972
        %v1044 = vunpack.c.l.b16 %v975
        %v1045 = vunpack.c.l.b16 %v979
        %v1046 = vunpack.c.l.b16 %v982
        %v1047 = vunpack.c.l.b16 %v986
        %v1048 = vunpack.c.l.b16 %v989
        %v1049 = vunpack.c.l.b16 %v993
        %v1050 = vunpack.c.l.b16 %v996
        %v1051 = vunpack.c.l.b16 %v1000
        %v1052 = vunpack.c.l.b16 %v1003
        %v1053 = vunpack.c.l.b16 %v1007
        %v1054 = vunpack.c.l.b16 %v1010
        %v1055 = vunpack.c.l.b16 %v1014
        %v1056 = vunpack.c.l.b16 %v1017
        %v1057 = vunpack.c.l.b16 %v1021
        %v1058 = vunpack.c.l.b16 %v1024
        %v1059 = vpack.c.b16 %v1044, %v1043
        %v1060 = vpack.c.b16 %v1046, %v1045
        %v1061 = vpack.c.b16 %v1048, %v1047
        %v1062 = vpack.c.b16 %v1050, %v1049
        %v1063 = vpack.c.b16 %v1052, %v1051
        %v1064 = vpack.c.b16 %v1054, %v1053
        %v1065 = vpack.c.b16 %v1056, %v1055
        %v1066 = vpack.c.b16 %v1058, %v1057
        %v1068 = vsel %vm503, %v1059, 0
        %v1071 = vsel %vm503, %v1060, 0
        %v1074 = vsel %vm503, %v1061, 0
        %v1077 = vsel %vm503, %v1062, 0
        %v1080 = vsel %vm503, %v1063, 0
        %v1083 = vsel %vm503, %v1064, 0
        %v1086 = vsel %vm503, %v1065, 0
        %v1089 = vsel %vm503, %v1066, 0
        %v1092 = vsel %vm528, %v1042, 0
        %1094 = vmatpush.bf16.msra.mxu0 0
        %1095 = vmatpush.bf16.msra.mxu0 0
        %1096 = vmatpush.bf16.msra.mxu0 0
        %1097 = vmatpush.bf16.msra.mxu0 0
        %1098 = vmatpush.bf16.msra.mxu0 0
        %1099 = vmatpush.bf16.msra.mxu0 0
        %1100 = vmatpush.bf16.msra.mxu0 0
        %1101 = vmatpush.bf16.msra.mxu0 %v1092
        %1102 = vmatmul.bf16.gmra.mxu0 %v1068
        %v1103 = vpop.f32.mrf.mxu0
        %v1104 = vadd.f32 0.0, %v1103
        %v1105 = vpop.f32.mrf.mxu0
        %v1106 = vadd.f32 0.0, %v1105
        %1107 = vmatmul.bf16.gmra.mxu0 %v1071
        %v1108 = vpop.f32.mrf.mxu0
        %v1109 = vadd.f32 0.0, %v1108
        %v1110 = vpop.f32.mrf.mxu0
        %v1111 = vadd.f32 0.0, %v1110
        %1112 = vmatmul.bf16.gmra.mxu0 %v1074
        %v1113 = vpop.f32.mrf.mxu0
        %v1114 = vadd.f32 0.0, %v1113
        %v1115 = vpop.f32.mrf.mxu0
        %v1116 = vadd.f32 0.0, %v1115
        %1117 = vmatmul.bf16.gmra.mxu0 %v1077
        %v1118 = vpop.f32.mrf.mxu0
        %v1119 = vadd.f32 0.0, %v1118
        %v1120 = vpop.f32.mrf.mxu0
        %v1121 = vadd.f32 0.0, %v1120
        %1122 = vmatmul.bf16.gmra.mxu0 %v1080
        %v1123 = vpop.f32.mrf.mxu0
        %v1124 = vadd.f32 0.0, %v1123
        %v1125 = vpop.f32.mrf.mxu0
        %v1126 = vadd.f32 0.0, %v1125
        %1127 = vmatmul.bf16.gmra.mxu0 %v1083
        %v1128 = vpop.f32.mrf.mxu0
        %v1129 = vadd.f32 0.0, %v1128
        %v1130 = vpop.f32.mrf.mxu0
        %v1131 = vadd.f32 0.0, %v1130
        %1132 = vmatmul.bf16.gmra.mxu0 %v1086
        %v1133 = vpop.f32.mrf.mxu0
        %v1134 = vadd.f32 0.0, %v1133
        %v1135 = vpop.f32.mrf.mxu0
        %v1136 = vadd.f32 0.0, %v1135
        %1137 = vmatmul.bf16.gmra.mxu0 %v1089
        %v1138 = vpop.f32.mrf.mxu0
        %v1139 = vadd.f32 0.0, %v1138
        %v1140 = vpop.f32.mrf.mxu0
        %v1141 = vadd.f32 0.0, %v1140
        %1142 = vdwg.mxu0
        %v1143 = vadd.f32 %v1025, %v1104
        %v1144 = vadd.f32 %v1026, %v1106
        %v1145 = vadd.f32 %v1027, %v1109
        %v1146 = vadd.f32 %v1028, %v1111
        %v1147 = vadd.f32 %v1029, %v1114
        %v1148 = vadd.f32 %v1030, %v1116
        %v1149 = vadd.f32 %v1031, %v1119
        %v1150 = vadd.f32 %v1032, %v1121
        %v1151 = vadd.f32 %v1033, %v1124
        %v1152 = vadd.f32 %v1034, %v1126
        %v1153 = vadd.f32 %v1035, %v1129
        %v1154 = vadd.f32 %v1036, %v1131
        %v1155 = vadd.f32 %v1037, %v1134
        %v1156 = vadd.f32 %v1038, %v1136
        %v1157 = vadd.f32 %v1039, %v1139
        %v1158 = vadd.f32 %v1040, %v1141
        %1159 = vst [vmem:[#allocation2] sm:$0xff] %v1143
        %1160 = vst [vmem:[#allocation2 + $0x8] sm:$0xff] %v1144
        %1161 = vst [vmem:[#allocation2 + $0x10] sm:$0xff] %v1145
        %1162 = vst [vmem:[#allocation2 + $0x18] sm:$0xff] %v1146
        %1163 = vst [vmem:[#allocation2 + $0x20] sm:$0xff] %v1147
        %1164 = vst [vmem:[#allocation2 + $0x28] sm:$0xff] %v1148
        %1165 = vst [vmem:[#allocation2 + $0x30] sm:$0xff] %v1149
        %1166 = vst [vmem:[#allocation2 + $0x38] sm:$0xff] %v1150
        %1167 = vst [vmem:[#allocation2 + $0x40] sm:$0xff] %v1151
        %1168 = vst [vmem:[#allocation2 + $0x48] sm:$0xff] %v1152
        %1169 = vst [vmem:[#allocation2 + $0x50] sm:$0xff] %v1153
        %1170 = vst [vmem:[#allocation2 + $0x58] sm:$0xff] %v1154
        %1171 = vst [vmem:[#allocation2 + $0x60] sm:$0xff] %v1155
        %1172 = vst [vmem:[#allocation2 + $0x68] sm:$0xff] %v1156
        %1173 = vst [vmem:[#allocation2 + $0x70] sm:$0xff] %v1157
        %1174 = vst [vmem:[#allocation2 + $0x78] sm:$0xff] %v1158
        %v1175 = vld [vmem:[%s391] sm:$0xf]
        %v1176 = vld [vmem:[%s391 + $0x4] sm:$0xf]
        %v1177 = vld [vmem:[%s391 + $0x8] sm:$0x1]
        %v1178 = vld [vmem:[%s391 + $0xc] sm:$0xf]
        %v1179 = vld [vmem:[%s391 + $0x10] sm:$0xf]
        %v1180 = vld [vmem:[%s391 + $0x14] sm:$0x1]
        %v1181 = vld [vmem:[%s391 + $0x18] sm:$0xf]
        %v1182 = vld [vmem:[%s391 + $0x1c] sm:$0xf]
        %v1183 = vld [vmem:[%s391 + $0x20] sm:$0x1]
        %v1184 = vld [vmem:[%s391 + $0x24] sm:$0xf]
        %v1185 = vld [vmem:[%s391 + $0x28] sm:$0xf]
        %v1186 = vld [vmem:[%s391 + $0x2c] sm:$0x1]
        %v1187 = vld [vmem:[%s391 + $0x30] sm:$0xf]
        %v1188 = vld [vmem:[%s391 + $0x34] sm:$0xf]
        %v1189 = vld [vmem:[%s391 + $0x38] sm:$0x1]
        %v1190 = vld [vmem:[%s391 + $0x3c] sm:$0xf]
        %v1191 = vld [vmem:[%s391 + $0x40] sm:$0xf]
        %v1192 = vld [vmem:[%s391 + $0x44] sm:$0x1]
        %v1193 = vld [vmem:[%s391 + $0x48] sm:$0xf]
        %v1194 = vld [vmem:[%s391 + $0x4c] sm:$0xf]
        %v1195 = vld [vmem:[%s391 + $0x50] sm:$0x1]
        %v1196 = vld [vmem:[%s391 + $0x54] sm:$0xf]
        %v1197 = vld [vmem:[%s391 + $0x58] sm:$0xf]
        %v1198 = vld [vmem:[%s391 + $0x5c] sm:$0x1]
        %v1199 = vld [vmem:[#allocation2] sm:$0xff]
        %v1200 = vld [vmem:[#allocation2 + $0x8] sm:$0xff]
        %v1201 = vld [vmem:[#allocation2 + $0x10] sm:$0xff]
        %v1202 = vld [vmem:[#allocation2 + $0x18] sm:$0xff]
        %v1203 = vld [vmem:[#allocation2 + $0x20] sm:$0xff]
        %v1204 = vld [vmem:[#allocation2 + $0x28] sm:$0xff]
        %v1205 = vld [vmem:[#allocation2 + $0x30] sm:$0xff]
        %v1206 = vld [vmem:[#allocation2 + $0x38] sm:$0xff]
        %v1207 = vld [vmem:[#allocation2 + $0x40] sm:$0xff]
        %v1208 = vld [vmem:[#allocation2 + $0x48] sm:$0xff]
        %v1209 = vld [vmem:[#allocation2 + $0x50] sm:$0xff]
        %v1210 = vld [vmem:[#allocation2 + $0x58] sm:$0xff]
        %v1211 = vld [vmem:[#allocation2 + $0x60] sm:$0xff]
        %v1212 = vld [vmem:[#allocation2 + $0x68] sm:$0xff]
        %v1213 = vld [vmem:[#allocation2 + $0x70] sm:$0xff]
        %v1214 = vld [vmem:[#allocation2 + $0x78] sm:$0xff]
        %s1215 = scalar_lea.vmem %s3, 6
        %v1216 = vld [vmem:[%s1215] sm:$0x3]
        %v1233 = vunpack.c.l.b16 %v1175
        %v1234 = vunpack.c.l.b16 %v1176
        %v1235 = vunpack.c.l.b16 %v1178
        %v1236 = vunpack.c.l.b16 %v1179
        %v1237 = vunpack.c.l.b16 %v1181
        %v1238 = vunpack.c.l.b16 %v1182
        %v1239 = vunpack.c.l.b16 %v1184
        %v1240 = vunpack.c.l.b16 %v1185
        %v1241 = vunpack.c.l.b16 %v1187
        %v1242 = vunpack.c.l.b16 %v1188
        %v1243 = vunpack.c.l.b16 %v1190
        %v1244 = vunpack.c.l.b16 %v1191
        %v1245 = vunpack.c.l.b16 %v1193
        %v1246 = vunpack.c.l.b16 %v1194
        %v1247 = vunpack.c.l.b16 %v1196
        %v1248 = vunpack.c.l.b16 %v1197
        %v1249 = vpack.c.b16 %v1234, %v1233
        %v1250 = vpack.c.b16 %v1236, %v1235
        %v1251 = vpack.c.b16 %v1238, %v1237
        %v1252 = vpack.c.b16 %v1240, %v1239
        %v1253 = vpack.c.b16 %v1242, %v1241
        %v1254 = vpack.c.b16 %v1244, %v1243
        %v1255 = vpack.c.b16 %v1246, %v1245
        %v1256 = vpack.c.b16 %v1248, %v1247
        %v1258 = vsel %vm503, %v1249, 0
        %v1261 = vsel %vm503, %v1250, 0
        %v1264 = vsel %vm503, %v1251, 0
        %v1267 = vsel %vm503, %v1252, 0
        %v1270 = vsel %vm503, %v1253, 0
        %v1273 = vsel %vm503, %v1254, 0
        %v1276 = vsel %vm503, %v1255, 0
        %v1279 = vsel %vm503, %v1256, 0
        %v1282 = vsel %vm528, %v1216, 0
        %1284 = vmatpush.bf16.msra.mxu0 0
        %1285 = vmatpush.bf16.msra.mxu0 0
        %1286 = vmatpush.bf16.msra.mxu0 0
        %1287 = vmatpush.bf16.msra.mxu0 0
        %1288 = vmatpush.bf16.msra.mxu0 0
        %1289 = vmatpush.bf16.msra.mxu0 0
        %1290 = vmatpush.bf16.msra.mxu0 0
        %1291 = vmatpush.bf16.msra.mxu0 %v1282
        %1292 = vmatmul.bf16.gmra.mxu0 %v1258
        %v1293 = vpop.f32.mrf.mxu0
        %v1294 = vadd.f32 0.0, %v1293
        %v1295 = vpop.f32.mrf.mxu0
        %v1296 = vadd.f32 0.0, %v1295
        %1297 = vmatmul.bf16.gmra.mxu0 %v1261
        %v1298 = vpop.f32.mrf.mxu0
        %v1299 = vadd.f32 0.0, %v1298
        %v1300 = vpop.f32.mrf.mxu0
        %v1301 = vadd.f32 0.0, %v1300
        %1302 = vmatmul.bf16.gmra.mxu0 %v1264
        %v1303 = vpop.f32.mrf.mxu0
        %v1304 = vadd.f32 0.0, %v1303
        %v1305 = vpop.f32.mrf.mxu0
        %v1306 = vadd.f32 0.0, %v1305
        %1307 = vmatmul.bf16.gmra.mxu0 %v1267
        %v1308 = vpop.f32.mrf.mxu0
        %v1309 = vadd.f32 0.0, %v1308
        %v1310 = vpop.f32.mrf.mxu0
        %v1311 = vadd.f32 0.0, %v1310
        %1312 = vmatmul.bf16.gmra.mxu0 %v1270
        %v1313 = vpop.f32.mrf.mxu0
        %v1314 = vadd.f32 0.0, %v1313
        %v1315 = vpop.f32.mrf.mxu0
        %v1316 = vadd.f32 0.0, %v1315
        %1317 = vmatmul.bf16.gmra.mxu0 %v1273
        %v1318 = vpop.f32.mrf.mxu0
        %v1319 = vadd.f32 0.0, %v1318
        %v1320 = vpop.f32.mrf.mxu0
        %v1321 = vadd.f32 0.0, %v1320
        %1322 = vmatmul.bf16.gmra.mxu0 %v1276
        %v1323 = vpop.f32.mrf.mxu0
        %v1324 = vadd.f32 0.0, %v1323
        %v1325 = vpop.f32.mrf.mxu0
        %v1326 = vadd.f32 0.0, %v1325
        %1327 = vmatmul.bf16.gmra.mxu0 %v1279
        %v1328 = vpop.f32.mrf.mxu0
        %v1329 = vadd.f32 0.0, %v1328
        %v1330 = vpop.f32.mrf.mxu0
        %v1331 = vadd.f32 0.0, %v1330
        %1332 = vdwg.mxu0
        %v1333 = vadd.f32 %v1199, %v1294
        %v1334 = vadd.f32 %v1200, %v1296
        %v1335 = vadd.f32 %v1201, %v1299
        %v1336 = vadd.f32 %v1202, %v1301
        %v1337 = vadd.f32 %v1203, %v1304
        %v1338 = vadd.f32 %v1204, %v1306
        %v1339 = vadd.f32 %v1205, %v1309
        %v1340 = vadd.f32 %v1206, %v1311
        %v1341 = vadd.f32 %v1207, %v1314
        %v1342 = vadd.f32 %v1208, %v1316
        %v1343 = vadd.f32 %v1209, %v1319
        %v1344 = vadd.f32 %v1210, %v1321
        %v1345 = vadd.f32 %v1211, %v1324
        %v1346 = vadd.f32 %v1212, %v1326
        %v1347 = vadd.f32 %v1213, %v1329
        %v1348 = vadd.f32 %v1214, %v1331
        %1349 = vst [vmem:[#allocation2] sm:$0xff] %v1333
        %1350 = vst [vmem:[#allocation2 + $0x8] sm:$0xff] %v1334
        %1351 = vst [vmem:[#allocation2 + $0x10] sm:$0xff] %v1335
        %1352 = vst [vmem:[#allocation2 + $0x18] sm:$0xff] %v1336
        %1353 = vst [vmem:[#allocation2 + $0x20] sm:$0xff] %v1337
        %1354 = vst [vmem:[#allocation2 + $0x28] sm:$0xff] %v1338
        %1355 = vst [vmem:[#allocation2 + $0x30] sm:$0xff] %v1339
        %1356 = vst [vmem:[#allocation2 + $0x38] sm:$0xff] %v1340
        %1357 = vst [vmem:[#allocation2 + $0x40] sm:$0xff] %v1341
        %1358 = vst [vmem:[#allocation2 + $0x48] sm:$0xff] %v1342
        %1359 = vst [vmem:[#allocation2 + $0x50] sm:$0xff] %v1343
        %1360 = vst [vmem:[#allocation2 + $0x58] sm:$0xff] %v1344
        %1361 = vst [vmem:[#allocation2 + $0x60] sm:$0xff] %v1345
        %1362 = vst [vmem:[#allocation2 + $0x68] sm:$0xff] %v1346
        %1363 = vst [vmem:[#allocation2 + $0x70] sm:$0xff] %v1347
        %1364 = vst [vmem:[#allocation2 + $0x78] sm:$0xff] %v1348
        %v1366 = vshrl.u32 %v1175, 16
        %v1368 = vrot.slane %v1366, 4
        %v1369 = vshll.u32 %v1175, 16
        %v1371 = vrot.slane %v1369, 5
        %v1372 = vor.u32 %v1368, %v1371
        %v1373 = vrot.slane %v1372, 4
        %v1375 = vshll.u32 %v1176, 16
        %v1377 = vrot.slane %v1375, 5
        %v1378 = vsel %vm615, %v1373, %v1377
        %v1379 = vshrl.u32 %v1176, 16
        %v1381 = vrot.slane %v1379, 4
        %v1382 = vor.u32 %v1381, %v1377
        %v1383 = vrot.slane %v1382, 4
        %v1385 = vshll.u32 %v1177, 16
        %v1387 = vrot.slane %v1385, 5
        %v1388 = vsel %vm615, %v1383, %v1387
        %v1390 = vshrl.u32 %v1178, 16
        %v1392 = vrot.slane %v1390, 4
        %v1393 = vshll.u32 %v1178, 16
        %v1395 = vrot.slane %v1393, 5
        %v1396 = vor.u32 %v1392, %v1395
        %v1397 = vrot.slane %v1396, 4
        %v1399 = vshll.u32 %v1179, 16
        %v1401 = vrot.slane %v1399, 5
        %v1402 = vsel %vm615, %v1397, %v1401
        %v1403 = vshrl.u32 %v1179, 16
        %v1405 = vrot.slane %v1403, 4
        %v1406 = vor.u32 %v1405, %v1401
        %v1407 = vrot.slane %v1406, 4
        %v1409 = vshll.u32 %v1180, 16
        %v1411 = vrot.slane %v1409, 5
        %v1412 = vsel %vm615, %v1407, %v1411
        %v1414 = vshrl.u32 %v1181, 16
        %v1416 = vrot.slane %v1414, 4
        %v1417 = vshll.u32 %v1181, 16
        %v1419 = vrot.slane %v1417, 5
        %v1420 = vor.u32 %v1416, %v1419
        %v1421 = vrot.slane %v1420, 4
        %v1423 = vshll.u32 %v1182, 16
        %v1425 = vrot.slane %v1423, 5
        %v1426 = vsel %vm615, %v1421, %v1425
        %v1427 = vshrl.u32 %v1182, 16
        %v1429 = vrot.slane %v1427, 4
        %v1430 = vor.u32 %v1429, %v1425
        %v1431 = vrot.slane %v1430, 4
        %v1433 = vshll.u32 %v1183, 16
        %v1435 = vrot.slane %v1433, 5
        %v1436 = vsel %vm615, %v1431, %v1435
        %v1438 = vshrl.u32 %v1184, 16
        %v1440 = vrot.slane %v1438, 4
        %v1441 = vshll.u32 %v1184, 16
        %v1443 = vrot.slane %v1441, 5
        %v1444 = vor.u32 %v1440, %v1443
        %v1445 = vrot.slane %v1444, 4
        %v1447 = vshll.u32 %v1185, 16
        %v1449 = vrot.slane %v1447, 5
        %v1450 = vsel %vm615, %v1445, %v1449
        %v1451 = vshrl.u32 %v1185, 16
        %v1453 = vrot.slane %v1451, 4
        %v1454 = vor.u32 %v1453, %v1449
        %v1455 = vrot.slane %v1454, 4
        %v1457 = vshll.u32 %v1186, 16
        %v1459 = vrot.slane %v1457, 5
        %v1460 = vsel %vm615, %v1455, %v1459
        %v1462 = vshrl.u32 %v1187, 16
        %v1464 = vrot.slane %v1462, 4
        %v1465 = vshll.u32 %v1187, 16
        %v1467 = vrot.slane %v1465, 5
        %v1468 = vor.u32 %v1464, %v1467
        %v1469 = vrot.slane %v1468, 4
        %v1471 = vshll.u32 %v1188, 16
        %v1473 = vrot.slane %v1471, 5
        %v1474 = vsel %vm615, %v1469, %v1473
        %v1475 = vshrl.u32 %v1188, 16
        %v1477 = vrot.slane %v1475, 4
        %v1478 = vor.u32 %v1477, %v1473
        %v1479 = vrot.slane %v1478, 4
        %v1481 = vshll.u32 %v1189, 16
        %v1483 = vrot.slane %v1481, 5
        %v1484 = vsel %vm615, %v1479, %v1483
        %v1486 = vshrl.u32 %v1190, 16
        %v1488 = vrot.slane %v1486, 4
        %v1489 = vshll.u32 %v1190, 16
        %v1491 = vrot.slane %v1489, 5
        %v1492 = vor.u32 %v1488, %v1491
        %v1493 = vrot.slane %v1492, 4
        %v1495 = vshll.u32 %v1191, 16
        %v1497 = vrot.slane %v1495, 5
        %v1498 = vsel %vm615, %v1493, %v1497
        %v1499 = vshrl.u32 %v1191, 16
        %v1501 = vrot.slane %v1499, 4
        %v1502 = vor.u32 %v1501, %v1497
        %v1503 = vrot.slane %v1502, 4
        %v1505 = vshll.u32 %v1192, 16
        %v1507 = vrot.slane %v1505, 5
        %v1508 = vsel %vm615, %v1503, %v1507
        %v1510 = vshrl.u32 %v1193, 16
        %v1512 = vrot.slane %v1510, 4
        %v1513 = vshll.u32 %v1193, 16
        %v1515 = vrot.slane %v1513, 5
        %v1516 = vor.u32 %v1512, %v1515
        %v1517 = vrot.slane %v1516, 4
        %v1519 = vshll.u32 %v1194, 16
        %v1521 = vrot.slane %v1519, 5
        %v1522 = vsel %vm615, %v1517, %v1521
        %v1523 = vshrl.u32 %v1194, 16
        %v1525 = vrot.slane %v1523, 4
        %v1526 = vor.u32 %v1525, %v1521
        %v1527 = vrot.slane %v1526, 4
        %v1529 = vshll.u32 %v1195, 16
        %v1531 = vrot.slane %v1529, 5
        %v1532 = vsel %vm615, %v1527, %v1531
        %v1534 = vshrl.u32 %v1196, 16
        %v1536 = vrot.slane %v1534, 4
        %v1537 = vshll.u32 %v1196, 16
        %v1539 = vrot.slane %v1537, 5
        %v1540 = vor.u32 %v1536, %v1539
        %v1541 = vrot.slane %v1540, 4
        %v1543 = vshll.u32 %v1197, 16
        %v1545 = vrot.slane %v1543, 5
        %v1546 = vsel %vm615, %v1541, %v1545
        %v1547 = vshrl.u32 %v1197, 16
        %v1549 = vrot.slane %v1547, 4
        %v1550 = vor.u32 %v1549, %v1545
        %v1551 = vrot.slane %v1550, 4
        %v1553 = vshll.u32 %v1198, 16
        %v1555 = vrot.slane %v1553, 5
        %v1556 = vsel %vm615, %v1551, %v1555
        %v1557 = vld [vmem:[#allocation2] sm:$0xff]
        %v1558 = vld [vmem:[#allocation2 + $0x8] sm:$0xff]
        %v1559 = vld [vmem:[#allocation2 + $0x10] sm:$0xff]
        %v1560 = vld [vmem:[#allocation2 + $0x18] sm:$0xff]
        %v1561 = vld [vmem:[#allocation2 + $0x20] sm:$0xff]
        %v1562 = vld [vmem:[#allocation2 + $0x28] sm:$0xff]
        %v1563 = vld [vmem:[#allocation2 + $0x30] sm:$0xff]
        %v1564 = vld [vmem:[#allocation2 + $0x38] sm:$0xff]
        %v1565 = vld [vmem:[#allocation2 + $0x40] sm:$0xff]
        %v1566 = vld [vmem:[#allocation2 + $0x48] sm:$0xff]
        %v1567 = vld [vmem:[#allocation2 + $0x50] sm:$0xff]
        %v1568 = vld [vmem:[#allocation2 + $0x58] sm:$0xff]
        %v1569 = vld [vmem:[#allocation2 + $0x60] sm:$0xff]
        %v1570 = vld [vmem:[#allocation2 + $0x68] sm:$0xff]
        %v1571 = vld [vmem:[#allocation2 + $0x70] sm:$0xff]
        %v1572 = vld [vmem:[#allocation2 + $0x78] sm:$0xff]
        %s1573 = scalar_lea.vmem %s3, 8
        %v1574 = vld [vmem:[%s1573] sm:$0x3]
        %v1575 = vunpack.c.l.b16 %v1378
        %v1576 = vunpack.c.l.b16 %v1388
        %v1577 = vunpack.c.l.b16 %v1402
        %v1578 = vunpack.c.l.b16 %v1412
        %v1579 = vunpack.c.l.b16 %v1426
        %v1580 = vunpack.c.l.b16 %v1436
        %v1581 = vunpack.c.l.b16 %v1450
        %v1582 = vunpack.c.l.b16 %v1460
        %v1583 = vunpack.c.l.b16 %v1474
        %v1584 = vunpack.c.l.b16 %v1484
        %v1585 = vunpack.c.l.b16 %v1498
        %v1586 = vunpack.c.l.b16 %v1508
        %v1587 = vunpack.c.l.b16 %v1522
        %v1588 = vunpack.c.l.b16 %v1532
        %v1589 = vunpack.c.l.b16 %v1546
        %v1590 = vunpack.c.l.b16 %v1556
        %v1591 = vpack.c.b16 %v1576, %v1575
        %v1592 = vpack.c.b16 %v1578, %v1577
        %v1593 = vpack.c.b16 %v1580, %v1579
        %v1594 = vpack.c.b16 %v1582, %v1581
        %v1595 = vpack.c.b16 %v1584, %v1583
        %v1596 = vpack.c.b16 %v1586, %v1585
        %v1597 = vpack.c.b16 %v1588, %v1587
        %v1598 = vpack.c.b16 %v1590, %v1589
        %v1600 = vsel %vm503, %v1591, 0
        %v1603 = vsel %vm503, %v1592, 0
        %v1606 = vsel %vm503, %v1593, 0
        %v1609 = vsel %vm503, %v1594, 0
        %v1612 = vsel %vm503, %v1595, 0
        %v1615 = vsel %vm503, %v1596, 0
        %v1618 = vsel %vm503, %v1597, 0
        %v1621 = vsel %vm503, %v1598, 0
        %v1624 = vsel %vm528, %v1574, 0
        %1626 = vmatpush.bf16.msra.mxu0 0
        %1627 = vmatpush.bf16.msra.mxu0 0
        %1628 = vmatpush.bf16.msra.mxu0 0
        %1629 = vmatpush.bf16.msra.mxu0 0
        %1630 = vmatpush.bf16.msra.mxu0 0
        %1631 = vmatpush.bf16.msra.mxu0 0
        %1632 = vmatpush.bf16.msra.mxu0 0
        %1633 = vmatpush.bf16.msra.mxu0 %v1624
        %1634 = vmatmul.bf16.gmra.mxu0 %v1600
        %v1635 = vpop.f32.mrf.mxu0
        %v1636 = vadd.f32 0.0, %v1635
        %v1637 = vpop.f32.mrf.mxu0
        %v1638 = vadd.f32 0.0, %v1637
        %1639 = vmatmul.bf16.gmra.mxu0 %v1603
        %v1640 = vpop.f32.mrf.mxu0
        %v1641 = vadd.f32 0.0, %v1640
        %v1642 = vpop.f32.mrf.mxu0
        %v1643 = vadd.f32 0.0, %v1642
        %1644 = vmatmul.bf16.gmra.mxu0 %v1606
        %v1645 = vpop.f32.mrf.mxu0
        %v1646 = vadd.f32 0.0, %v1645
        %v1647 = vpop.f32.mrf.mxu0
        %v1648 = vadd.f32 0.0, %v1647
        %1649 = vmatmul.bf16.gmra.mxu0 %v1609
        %v1650 = vpop.f32.mrf.mxu0
        %v1651 = vadd.f32 0.0, %v1650
        %v1652 = vpop.f32.mrf.mxu0
        %v1653 = vadd.f32 0.0, %v1652
        %1654 = vmatmul.bf16.gmra.mxu0 %v1612
        %v1655 = vpop.f32.mrf.mxu0
        %v1656 = vadd.f32 0.0, %v1655
        %v1657 = vpop.f32.mrf.mxu0
        %v1658 = vadd.f32 0.0, %v1657
        %1659 = vmatmul.bf16.gmra.mxu0 %v1615
        %v1660 = vpop.f32.mrf.mxu0
        %v1661 = vadd.f32 0.0, %v1660
        %v1662 = vpop.f32.mrf.mxu0
        %v1663 = vadd.f32 0.0, %v1662
        %1664 = vmatmul.bf16.gmra.mxu0 %v1618
        %v1665 = vpop.f32.mrf.mxu0
        %v1666 = vadd.f32 0.0, %v1665
        %v1667 = vpop.f32.mrf.mxu0
        %v1668 = vadd.f32 0.0, %v1667
        %1669 = vmatmul.bf16.gmra.mxu0 %v1621
        %v1670 = vpop.f32.mrf.mxu0
        %v1671 = vadd.f32 0.0, %v1670
        %v1672 = vpop.f32.mrf.mxu0
        %v1673 = vadd.f32 0.0, %v1672
        %1674 = vdwg.mxu0
        %v1675 = vadd.f32 %v1557, %v1636
        %v1676 = vadd.f32 %v1558, %v1638
        %v1677 = vadd.f32 %v1559, %v1641
        %v1678 = vadd.f32 %v1560, %v1643
        %v1679 = vadd.f32 %v1561, %v1646
        %v1680 = vadd.f32 %v1562, %v1648
        %v1681 = vadd.f32 %v1563, %v1651
        %v1682 = vadd.f32 %v1564, %v1653
        %v1683 = vadd.f32 %v1565, %v1656
        %v1684 = vadd.f32 %v1566, %v1658
        %v1685 = vadd.f32 %v1567, %v1661
        %v1686 = vadd.f32 %v1568, %v1663
        %v1687 = vadd.f32 %v1569, %v1666
        %v1688 = vadd.f32 %v1570, %v1668
        %v1689 = vadd.f32 %v1571, %v1671
        %v1690 = vadd.f32 %v1572, %v1673
        %1691 = vst [vmem:[#allocation2] sm:$0xff] %v1675
        %1692 = vst [vmem:[#allocation2 + $0x8] sm:$0xff] %v1676
        %1693 = vst [vmem:[#allocation2 + $0x10] sm:$0xff] %v1677
        %1694 = vst [vmem:[#allocation2 + $0x18] sm:$0xff] %v1678
        %1695 = vst [vmem:[#allocation2 + $0x20] sm:$0xff] %v1679
        %1696 = vst [vmem:[#allocation2 + $0x28] sm:$0xff] %v1680
        %1697 = vst [vmem:[#allocation2 + $0x30] sm:$0xff] %v1681
        %1698 = vst [vmem:[#allocation2 + $0x38] sm:$0xff] %v1682
        %1699 = vst [vmem:[#allocation2 + $0x40] sm:$0xff] %v1683
        %1700 = vst [vmem:[#allocation2 + $0x48] sm:$0xff] %v1684
        %1701 = vst [vmem:[#allocation2 + $0x50] sm:$0xff] %v1685
        %1702 = vst [vmem:[#allocation2 + $0x58] sm:$0xff] %v1686
        %1703 = vst [vmem:[#allocation2 + $0x60] sm:$0xff] %v1687
        %1704 = vst [vmem:[#allocation2 + $0x68] sm:$0xff] %v1688
        %1705 = vst [vmem:[#allocation2 + $0x70] sm:$0xff] %v1689
        %1706 = vst [vmem:[#allocation2 + $0x78] sm:$0xff] %v1690
        %v1715 = vrot.slane %v1175, 5
        %v1716 = vrot.slane %v1715, 4
        %v1717 = vrot.slane %v1176, 5
        %v1718 = vsel %vm968, %v1716, %v1717
        %v1719 = vrot.slane %v1717, 4
        %v1720 = vrot.slane %v1177, 5
        %v1721 = vsel %vm968, %v1719, %v1720
        %v1722 = vrot.slane %v1178, 5
        %v1723 = vrot.slane %v1722, 4
        %v1724 = vrot.slane %v1179, 5
        %v1725 = vsel %vm968, %v1723, %v1724
        %v1726 = vrot.slane %v1724, 4
        %v1727 = vrot.slane %v1180, 5
        %v1728 = vsel %vm968, %v1726, %v1727
        %v1729 = vrot.slane %v1181, 5
        %v1730 = vrot.slane %v1729, 4
        %v1731 = vrot.slane %v1182, 5
        %v1732 = vsel %vm968, %v1730, %v1731
        %v1733 = vrot.slane %v1731, 4
        %v1734 = vrot.slane %v1183, 5
        %v1735 = vsel %vm968, %v1733, %v1734
        %v1736 = vrot.slane %v1184, 5
        %v1737 = vrot.slane %v1736, 4
        %v1738 = vrot.slane %v1185, 5
        %v1739 = vsel %vm968, %v1737, %v1738
        %v1740 = vrot.slane %v1738, 4
        %v1741 = vrot.slane %v1186, 5
        %v1742 = vsel %vm968, %v1740, %v1741
        %v1743 = vrot.slane %v1187, 5
        %v1744 = vrot.slane %v1743, 4
        %v1745 = vrot.slane %v1188, 5
        %v1746 = vsel %vm968, %v1744, %v1745
        %v1747 = vrot.slane %v1745, 4
        %v1748 = vrot.slane %v1189, 5
        %v1749 = vsel %vm968, %v1747, %v1748
        %v1750 = vrot.slane %v1190, 5
        %v1751 = vrot.slane %v1750, 4
        %v1752 = vrot.slane %v1191, 5
        %v1753 = vsel %vm968, %v1751, %v1752
        %v1754 = vrot.slane %v1752, 4
        %v1755 = vrot.slane %v1192, 5
        %v1756 = vsel %vm968, %v1754, %v1755
        %v1757 = vrot.slane %v1193, 5
        %v1758 = vrot.slane %v1757, 4
        %v1759 = vrot.slane %v1194, 5
        %v1760 = vsel %vm968, %v1758, %v1759
        %v1761 = vrot.slane %v1759, 4
        %v1762 = vrot.slane %v1195, 5
        %v1763 = vsel %vm968, %v1761, %v1762
        %v1764 = vrot.slane %v1196, 5
        %v1765 = vrot.slane %v1764, 4
        %v1766 = vrot.slane %v1197, 5
        %v1767 = vsel %vm968, %v1765, %v1766
        %v1768 = vrot.slane %v1766, 4
        %v1769 = vrot.slane %v1198, 5
        %v1770 = vsel %vm968, %v1768, %v1769
        %v1771 = vld [vmem:[#allocation2] sm:$0xff]
        %v1772 = vld [vmem:[#allocation2 + $0x8] sm:$0xff]
        %v1773 = vld [vmem:[#allocation2 + $0x10] sm:$0xff]
        %v1774 = vld [vmem:[#allocation2 + $0x18] sm:$0xff]
        %v1775 = vld [vmem:[#allocation2 + $0x20] sm:$0xff]
        %v1776 = vld [vmem:[#allocation2 + $0x28] sm:$0xff]
        %v1777 = vld [vmem:[#allocation2 + $0x30] sm:$0xff]
        %v1778 = vld [vmem:[#allocation2 + $0x38] sm:$0xff]
        %v1779 = vld [vmem:[#allocation2 + $0x40] sm:$0xff]
        %v1780 = vld [vmem:[#allocation2 + $0x48] sm:$0xff]
        %v1781 = vld [vmem:[#allocation2 + $0x50] sm:$0xff]
        %v1782 = vld [vmem:[#allocation2 + $0x58] sm:$0xff]
        %v1783 = vld [vmem:[#allocation2 + $0x60] sm:$0xff]
        %v1784 = vld [vmem:[#allocation2 + $0x68] sm:$0xff]
        %v1785 = vld [vmem:[#allocation2 + $0x70] sm:$0xff]
        %v1786 = vld [vmem:[#allocation2 + $0x78] sm:$0xff]
        %s1787 = scalar_lea.vmem %s3, 10
        %v1788 = vld [vmem:[%s1787] sm:$0x3]
        %v1789 = vunpack.c.l.b16 %v1718
        %v1790 = vunpack.c.l.b16 %v1721
        %v1791 = vunpack.c.l.b16 %v1725
        %v1792 = vunpack.c.l.b16 %v1728
        %v1793 = vunpack.c.l.b16 %v1732
        %v1794 = vunpack.c.l.b16 %v1735
        %v1795 = vunpack.c.l.b16 %v1739
        %v1796 = vunpack.c.l.b16 %v1742
        %v1797 = vunpack.c.l.b16 %v1746
        %v1798 = vunpack.c.l.b16 %v1749
        %v1799 = vunpack.c.l.b16 %v1753
        %v1800 = vunpack.c.l.b16 %v1756
        %v1801 = vunpack.c.l.b16 %v1760
        %v1802 = vunpack.c.l.b16 %v1763
        %v1803 = vunpack.c.l.b16 %v1767
        %v1804 = vunpack.c.l.b16 %v1770
        %v1805 = vpack.c.b16 %v1790, %v1789
        %v1806 = vpack.c.b16 %v1792, %v1791
        %v1807 = vpack.c.b16 %v1794, %v1793
        %v1808 = vpack.c.b16 %v1796, %v1795
        %v1809 = vpack.c.b16 %v1798, %v1797
        %v1810 = vpack.c.b16 %v1800, %v1799
        %v1811 = vpack.c.b16 %v1802, %v1801
        %v1812 = vpack.c.b16 %v1804, %v1803
        %v1814 = vsel %vm503, %v1805, 0
        %v1817 = vsel %vm503, %v1806, 0
        %v1820 = vsel %vm503, %v1807, 0
        %v1823 = vsel %vm503, %v1808, 0
        %v1826 = vsel %vm503, %v1809, 0
        %v1829 = vsel %vm503, %v1810, 0
        %v1832 = vsel %vm503, %v1811, 0
        %v1835 = vsel %vm503, %v1812, 0
        %v1838 = vsel %vm528, %v1788, 0
        %1840 = vmatpush.bf16.msra.mxu0 0
        %1841 = vmatpush.bf16.msra.mxu0 0
        %1842 = vmatpush.bf16.msra.mxu0 0
        %1843 = vmatpush.bf16.msra.mxu0 0
        %1844 = vmatpush.bf16.msra.mxu0 0
        %1845 = vmatpush.bf16.msra.mxu0 0
        %1846 = vmatpush.bf16.msra.mxu0 0
        %1847 = vmatpush.bf16.msra.mxu0 %v1838
        %1848 = vmatmul.bf16.gmra.mxu0 %v1814
        %v1849 = vpop.f32.mrf.mxu0
        %v1850 = vadd.f32 0.0, %v1849
        %v1851 = vpop.f32.mrf.mxu0
        %v1852 = vadd.f32 0.0, %v1851
        %1853 = vmatmul.bf16.gmra.mxu0 %v1817
        %v1854 = vpop.f32.mrf.mxu0
        %v1855 = vadd.f32 0.0, %v1854
        %v1856 = vpop.f32.mrf.mxu0
        %v1857 = vadd.f32 0.0, %v1856
        %1858 = vmatmul.bf16.gmra.mxu0 %v1820
        %v1859 = vpop.f32.mrf.mxu0
        %v1860 = vadd.f32 0.0, %v1859
        %v1861 = vpop.f32.mrf.mxu0
        %v1862 = vadd.f32 0.0, %v1861
        %1863 = vmatmul.bf16.gmra.mxu0 %v1823
        %v1864 = vpop.f32.mrf.mxu0
        %v1865 = vadd.f32 0.0, %v1864
        %v1866 = vpop.f32.mrf.mxu0
        %v1867 = vadd.f32 0.0, %v1866
        %1868 = vmatmul.bf16.gmra.mxu0 %v1826
        %v1869 = vpop.f32.mrf.mxu0
        %v1870 = vadd.f32 0.0, %v1869
        %v1871 = vpop.f32.mrf.mxu0
        %v1872 = vadd.f32 0.0, %v1871
        %1873 = vmatmul.bf16.gmra.mxu0 %v1829
        %v1874 = vpop.f32.mrf.mxu0
        %v1875 = vadd.f32 0.0, %v1874
        %v1876 = vpop.f32.mrf.mxu0
        %v1877 = vadd.f32 0.0, %v1876
        %1878 = vmatmul.bf16.gmra.mxu0 %v1832
        %v1879 = vpop.f32.mrf.mxu0
        %v1880 = vadd.f32 0.0, %v1879
        %v1881 = vpop.f32.mrf.mxu0
        %v1882 = vadd.f32 0.0, %v1881
        %1883 = vmatmul.bf16.gmra.mxu0 %v1835
        %v1884 = vpop.f32.mrf.mxu0
        %v1885 = vadd.f32 0.0, %v1884
        %v1886 = vpop.f32.mrf.mxu0
        %v1887 = vadd.f32 0.0, %v1886
        %1888 = vdwg.mxu0
        %v1889 = vadd.f32 %v1771, %v1850
        %v1890 = vadd.f32 %v1772, %v1852
        %v1891 = vadd.f32 %v1773, %v1855
        %v1892 = vadd.f32 %v1774, %v1857
        %v1893 = vadd.f32 %v1775, %v1860
        %v1894 = vadd.f32 %v1776, %v1862
        %v1895 = vadd.f32 %v1777, %v1865
        %v1896 = vadd.f32 %v1778, %v1867
        %v1897 = vadd.f32 %v1779, %v1870
        %v1898 = vadd.f32 %v1780, %v1872
        %v1899 = vadd.f32 %v1781, %v1875
        %v1900 = vadd.f32 %v1782, %v1877
        %v1901 = vadd.f32 %v1783, %v1880
        %v1902 = vadd.f32 %v1784, %v1882
        %v1903 = vadd.f32 %v1785, %v1885
        %v1904 = vadd.f32 %v1786, %v1887
        %1905 = vst [vmem:[#allocation2] sm:$0xff] %v1889
        %1906 = vst [vmem:[#allocation2 + $0x8] sm:$0xff] %v1890
        %1907 = vst [vmem:[#allocation2 + $0x10] sm:$0xff] %v1891
        %1908 = vst [vmem:[#allocation2 + $0x18] sm:$0xff] %v1892
        %1909 = vst [vmem:[#allocation2 + $0x20] sm:$0xff] %v1893
        %1910 = vst [vmem:[#allocation2 + $0x28] sm:$0xff] %v1894
        %1911 = vst [vmem:[#allocation2 + $0x30] sm:$0xff] %v1895
        %1912 = vst [vmem:[#allocation2 + $0x38] sm:$0xff] %v1896
        %1913 = vst [vmem:[#allocation2 + $0x40] sm:$0xff] %v1897
        %1914 = vst [vmem:[#allocation2 + $0x48] sm:$0xff] %v1898
        %1915 = vst [vmem:[#allocation2 + $0x50] sm:$0xff] %v1899
        %1916 = vst [vmem:[#allocation2 + $0x58] sm:$0xff] %v1900
        %1917 = vst [vmem:[#allocation2 + $0x60] sm:$0xff] %v1901
        %1918 = vst [vmem:[#allocation2 + $0x68] sm:$0xff] %v1902
        %1919 = vst [vmem:[#allocation2 + $0x70] sm:$0xff] %v1903
        %1920 = vst [vmem:[#allocation2 + $0x78] sm:$0xff] %v1904
        %v1921 = vld [vmem:[%s402] sm:$0xf]
        %v1922 = vld [vmem:[%s402 + $0x4] sm:$0xf]
        %v1923 = vld [vmem:[%s402 + $0x8] sm:$0x1]
        %v1924 = vld [vmem:[%s402 + $0xc] sm:$0xf]
        %v1925 = vld [vmem:[%s402 + $0x10] sm:$0xf]
        %v1926 = vld [vmem:[%s402 + $0x14] sm:$0x1]
        %v1927 = vld [vmem:[%s402 + $0x18] sm:$0xf]
        %v1928 = vld [vmem:[%s402 + $0x1c] sm:$0xf]
        %v1929 = vld [vmem:[%s402 + $0x20] sm:$0x1]
        %v1930 = vld [vmem:[%s402 + $0x24] sm:$0xf]
        %v1931 = vld [vmem:[%s402 + $0x28] sm:$0xf]
        %v1932 = vld [vmem:[%s402 + $0x2c] sm:$0x1]
        %v1933 = vld [vmem:[%s402 + $0x30] sm:$0xf]
        %v1934 = vld [vmem:[%s402 + $0x34] sm:$0xf]
        %v1935 = vld [vmem:[%s402 + $0x38] sm:$0x1]
        %v1936 = vld [vmem:[%s402 + $0x3c] sm:$0xf]
        %v1937 = vld [vmem:[%s402 + $0x40] sm:$0xf]
        %v1938 = vld [vmem:[%s402 + $0x44] sm:$0x1]
        %v1939 = vld [vmem:[%s402 + $0x48] sm:$0xf]
        %v1940 = vld [vmem:[%s402 + $0x4c] sm:$0xf]
        %v1941 = vld [vmem:[%s402 + $0x50] sm:$0x1]
        %v1942 = vld [vmem:[%s402 + $0x54] sm:$0xf]
        %v1943 = vld [vmem:[%s402 + $0x58] sm:$0xf]
        %v1944 = vld [vmem:[%s402 + $0x5c] sm:$0x1]
        %v1945 = vld [vmem:[#allocation2] sm:$0xff]
        %v1946 = vld [vmem:[#allocation2 + $0x8] sm:$0xff]
        %v1947 = vld [vmem:[#allocation2 + $0x10] sm:$0xff]
        %v1948 = vld [vmem:[#allocation2 + $0x18] sm:$0xff]
        %v1949 = vld [vmem:[#allocation2 + $0x20] sm:$0xff]
        %v1950 = vld [vmem:[#allocation2 + $0x28] sm:$0xff]
        %v1951 = vld [vmem:[#allocation2 + $0x30] sm:$0xff]
        %v1952 = vld [vmem:[#allocation2 + $0x38] sm:$0xff]
        %v1953 = vld [vmem:[#allocation2 + $0x40] sm:$0xff]
        %v1954 = vld [vmem:[#allocation2 + $0x48] sm:$0xff]
        %v1955 = vld [vmem:[#allocation2 + $0x50] sm:$0xff]
        %v1956 = vld [vmem:[#allocation2 + $0x58] sm:$0xff]
        %v1957 = vld [vmem:[#allocation2 + $0x60] sm:$0xff]
        %v1958 = vld [vmem:[#allocation2 + $0x68] sm:$0xff]
        %v1959 = vld [vmem:[#allocation2 + $0x70] sm:$0xff]
        %v1960 = vld [vmem:[#allocation2 + $0x78] sm:$0xff]
        %s1961 = scalar_lea.vmem %s3, 12
        %v1962 = vld [vmem:[%s1961] sm:$0x3]
        %v1979 = vunpack.c.l.b16 %v1921
        %v1980 = vunpack.c.l.b16 %v1922
        %v1981 = vunpack.c.l.b16 %v1924
        %v1982 = vunpack.c.l.b16 %v1925
        %v1983 = vunpack.c.l.b16 %v1927
        %v1984 = vunpack.c.l.b16 %v1928
        %v1985 = vunpack.c.l.b16 %v1930
        %v1986 = vunpack.c.l.b16 %v1931
        %v1987 = vunpack.c.l.b16 %v1933
        %v1988 = vunpack.c.l.b16 %v1934
        %v1989 = vunpack.c.l.b16 %v1936
        %v1990 = vunpack.c.l.b16 %v1937
        %v1991 = vunpack.c.l.b16 %v1939
        %v1992 = vunpack.c.l.b16 %v1940
        %v1993 = vunpack.c.l.b16 %v1942
        %v1994 = vunpack.c.l.b16 %v1943
        %v1995 = vpack.c.b16 %v1980, %v1979
        %v1996 = vpack.c.b16 %v1982, %v1981
        %v1997 = vpack.c.b16 %v1984, %v1983
        %v1998 = vpack.c.b16 %v1986, %v1985
        %v1999 = vpack.c.b16 %v1988, %v1987
        %v2000 = vpack.c.b16 %v1990, %v1989
        %v2001 = vpack.c.b16 %v1992, %v1991
        %v2002 = vpack.c.b16 %v1994, %v1993
        %v2004 = vsel %vm503, %v1995, 0
        %v2007 = vsel %vm503, %v1996, 0
        %v2010 = vsel %vm503, %v1997, 0
        %v2013 = vsel %vm503, %v1998, 0
        %v2016 = vsel %vm503, %v1999, 0
        %v2019 = vsel %vm503, %v2000, 0
        %v2022 = vsel %vm503, %v2001, 0
        %v2025 = vsel %vm503, %v2002, 0
        %v2028 = vsel %vm528, %v1962, 0
        %2030 = vmatpush.bf16.msra.mxu0 0
        %2031 = vmatpush.bf16.msra.mxu0 0
        %2032 = vmatpush.bf16.msra.mxu0 0
        %2033 = vmatpush.bf16.msra.mxu0 0
        %2034 = vmatpush.bf16.msra.mxu0 0
        %2035 = vmatpush.bf16.msra.mxu0 0
        %2036 = vmatpush.bf16.msra.mxu0 0
        %2037 = vmatpush.bf16.msra.mxu0 %v2028
        %2038 = vmatmul.bf16.gmra.mxu0 %v2004
        %v2039 = vpop.f32.mrf.mxu0
        %v2040 = vadd.f32 0.0, %v2039
        %v2041 = vpop.f32.mrf.mxu0
        %v2042 = vadd.f32 0.0, %v2041
        %2043 = vmatmul.bf16.gmra.mxu0 %v2007
        %v2044 = vpop.f32.mrf.mxu0
        %v2045 = vadd.f32 0.0, %v2044
        %v2046 = vpop.f32.mrf.mxu0
        %v2047 = vadd.f32 0.0, %v2046
        %2048 = vmatmul.bf16.gmra.mxu0 %v2010
        %v2049 = vpop.f32.mrf.mxu0
        %v2050 = vadd.f32 0.0, %v2049
        %v2051 = vpop.f32.mrf.mxu0
        %v2052 = vadd.f32 0.0, %v2051
        %2053 = vmatmul.bf16.gmra.mxu0 %v2013
        %v2054 = vpop.f32.mrf.mxu0
        %v2055 = vadd.f32 0.0, %v2054
        %v2056 = vpop.f32.mrf.mxu0
        %v2057 = vadd.f32 0.0, %v2056
        %2058 = vmatmul.bf16.gmra.mxu0 %v2016
        %v2059 = vpop.f32.mrf.mxu0
        %v2060 = vadd.f32 0.0, %v2059
        %v2061 = vpop.f32.mrf.mxu0
        %v2062 = vadd.f32 0.0, %v2061
        %2063 = vmatmul.bf16.gmra.mxu0 %v2019
        %v2064 = vpop.f32.mrf.mxu0
        %v2065 = vadd.f32 0.0, %v2064
        %v2066 = vpop.f32.mrf.mxu0
        %v2067 = vadd.f32 0.0, %v2066
        %2068 = vmatmul.bf16.gmra.mxu0 %v2022
        %v2069 = vpop.f32.mrf.mxu0
        %v2070 = vadd.f32 0.0, %v2069
        %v2071 = vpop.f32.mrf.mxu0
        %v2072 = vadd.f32 0.0, %v2071
        %2073 = vmatmul.bf16.gmra.mxu0 %v2025
        %v2074 = vpop.f32.mrf.mxu0
        %v2075 = vadd.f32 0.0, %v2074
        %v2076 = vpop.f32.mrf.mxu0
        %v2077 = vadd.f32 0.0, %v2076
        %2078 = vdwg.mxu0
        %v2079 = vadd.f32 %v1945, %v2040
        %v2080 = vadd.f32 %v1946, %v2042
        %v2081 = vadd.f32 %v1947, %v2045
        %v2082 = vadd.f32 %v1948, %v2047
        %v2083 = vadd.f32 %v1949, %v2050
        %v2084 = vadd.f32 %v1950, %v2052
        %v2085 = vadd.f32 %v1951, %v2055
        %v2086 = vadd.f32 %v1952, %v2057
        %v2087 = vadd.f32 %v1953, %v2060
        %v2088 = vadd.f32 %v1954, %v2062
        %v2089 = vadd.f32 %v1955, %v2065
        %v2090 = vadd.f32 %v1956, %v2067
        %v2091 = vadd.f32 %v1957, %v2070
        %v2092 = vadd.f32 %v1958, %v2072
        %v2093 = vadd.f32 %v1959, %v2075
        %v2094 = vadd.f32 %v1960, %v2077
        %2095 = vst [vmem:[#allocation2] sm:$0xff] %v2079
        %2096 = vst [vmem:[#allocation2 + $0x8] sm:$0xff] %v2080
        %2097 = vst [vmem:[#allocation2 + $0x10] sm:$0xff] %v2081
        %2098 = vst [vmem:[#allocation2 + $0x18] sm:$0xff] %v2082
        %2099 = vst [vmem:[#allocation2 + $0x20] sm:$0xff] %v2083
        %2100 = vst [vmem:[#allocation2 + $0x28] sm:$0xff] %v2084
        %2101 = vst [vmem:[#allocation2 + $0x30] sm:$0xff] %v2085
        %2102 = vst [vmem:[#allocation2 + $0x38] sm:$0xff] %v2086
        %2103 = vst [vmem:[#allocation2 + $0x40] sm:$0xff] %v2087
        %2104 = vst [vmem:[#allocation2 + $0x48] sm:$0xff] %v2088
        %2105 = vst [vmem:[#allocation2 + $0x50] sm:$0xff] %v2089
        %2106 = vst [vmem:[#allocation2 + $0x58] sm:$0xff] %v2090
        %2107 = vst [vmem:[#allocation2 + $0x60] sm:$0xff] %v2091
        %2108 = vst [vmem:[#allocation2 + $0x68] sm:$0xff] %v2092
        %2109 = vst [vmem:[#allocation2 + $0x70] sm:$0xff] %v2093
        %2110 = vst [vmem:[#allocation2 + $0x78] sm:$0xff] %v2094
        %v2112 = vshrl.u32 %v1921, 16
        %v2114 = vrot.slane %v2112, 4
        %v2115 = vshll.u32 %v1921, 16
        %v2117 = vrot.slane %v2115, 5
        %v2118 = vor.u32 %v2114, %v2117
        %v2119 = vrot.slane %v2118, 4
        %v2121 = vshll.u32 %v1922, 16
        %v2123 = vrot.slane %v2121, 5
        %v2124 = vsel %vm615, %v2119, %v2123
        %v2125 = vshrl.u32 %v1922, 16
        %v2127 = vrot.slane %v2125, 4
        %v2128 = vor.u32 %v2127, %v2123
        %v2129 = vrot.slane %v2128, 4
        %v2131 = vshll.u32 %v1923, 16
        %v2133 = vrot.slane %v2131, 5
        %v2134 = vsel %vm615, %v2129, %v2133
        %v2136 = vshrl.u32 %v1924, 16
        %v2138 = vrot.slane %v2136, 4
        %v2139 = vshll.u32 %v1924, 16
        %v2141 = vrot.slane %v2139, 5
        %v2142 = vor.u32 %v2138, %v2141
        %v2143 = vrot.slane %v2142, 4
        %v2145 = vshll.u32 %v1925, 16
        %v2147 = vrot.slane %v2145, 5
        %v2148 = vsel %vm615, %v2143, %v2147
        %v2149 = vshrl.u32 %v1925, 16
        %v2151 = vrot.slane %v2149, 4
        %v2152 = vor.u32 %v2151, %v2147
        %v2153 = vrot.slane %v2152, 4
        %v2155 = vshll.u32 %v1926, 16
        %v2157 = vrot.slane %v2155, 5
        %v2158 = vsel %vm615, %v2153, %v2157
        %v2160 = vshrl.u32 %v1927, 16
        %v2162 = vrot.slane %v2160, 4
        %v2163 = vshll.u32 %v1927, 16
        %v2165 = vrot.slane %v2163, 5
        %v2166 = vor.u32 %v2162, %v2165
        %v2167 = vrot.slane %v2166, 4
        %v2169 = vshll.u32 %v1928, 16
        %v2171 = vrot.slane %v2169, 5
        %v2172 = vsel %vm615, %v2167, %v2171
        %v2173 = vshrl.u32 %v1928, 16
        %v2175 = vrot.slane %v2173, 4
        %v2176 = vor.u32 %v2175, %v2171
        %v2177 = vrot.slane %v2176, 4
        %v2179 = vshll.u32 %v1929, 16
        %v2181 = vrot.slane %v2179, 5
        %v2182 = vsel %vm615, %v2177, %v2181
        %v2184 = vshrl.u32 %v1930, 16
        %v2186 = vrot.slane %v2184, 4
        %v2187 = vshll.u32 %v1930, 16
        %v2189 = vrot.slane %v2187, 5
        %v2190 = vor.u32 %v2186, %v2189
        %v2191 = vrot.slane %v2190, 4
        %v2193 = vshll.u32 %v1931, 16
        %v2195 = vrot.slane %v2193, 5
        %v2196 = vsel %vm615, %v2191, %v2195
        %v2197 = vshrl.u32 %v1931, 16
        %v2199 = vrot.slane %v2197, 4
        %v2200 = vor.u32 %v2199, %v2195
        %v2201 = vrot.slane %v2200, 4
        %v2203 = vshll.u32 %v1932, 16
        %v2205 = vrot.slane %v2203, 5
        %v2206 = vsel %vm615, %v2201, %v2205
        %v2208 = vshrl.u32 %v1933, 16
        %v2210 = vrot.slane %v2208, 4
        %v2211 = vshll.u32 %v1933, 16
        %v2213 = vrot.slane %v2211, 5
        %v2214 = vor.u32 %v2210, %v2213
        %v2215 = vrot.slane %v2214, 4
        %v2217 = vshll.u32 %v1934, 16
        %v2219 = vrot.slane %v2217, 5
        %v2220 = vsel %vm615, %v2215, %v2219
        %v2221 = vshrl.u32 %v1934, 16
        %v2223 = vrot.slane %v2221, 4
        %v2224 = vor.u32 %v2223, %v2219
        %v2225 = vrot.slane %v2224, 4
        %v2227 = vshll.u32 %v1935, 16
        %v2229 = vrot.slane %v2227, 5
        %v2230 = vsel %vm615, %v2225, %v2229
        %v2232 = vshrl.u32 %v1936, 16
        %v2234 = vrot.slane %v2232, 4
        %v2235 = vshll.u32 %v1936, 16
        %v2237 = vrot.slane %v2235, 5
        %v2238 = vor.u32 %v2234, %v2237
        %v2239 = vrot.slane %v2238, 4
        %v2241 = vshll.u32 %v1937, 16
        %v2243 = vrot.slane %v2241, 5
        %v2244 = vsel %vm615, %v2239, %v2243
        %v2245 = vshrl.u32 %v1937, 16
        %v2247 = vrot.slane %v2245, 4
        %v2248 = vor.u32 %v2247, %v2243
        %v2249 = vrot.slane %v2248, 4
        %v2251 = vshll.u32 %v1938, 16
        %v2253 = vrot.slane %v2251, 5
        %v2254 = vsel %vm615, %v2249, %v2253
        %v2256 = vshrl.u32 %v1939, 16
        %v2258 = vrot.slane %v2256, 4
        %v2259 = vshll.u32 %v1939, 16
        %v2261 = vrot.slane %v2259, 5
        %v2262 = vor.u32 %v2258, %v2261
        %v2263 = vrot.slane %v2262, 4
        %v2265 = vshll.u32 %v1940, 16
        %v2267 = vrot.slane %v2265, 5
        %v2268 = vsel %vm615, %v2263, %v2267
        %v2269 = vshrl.u32 %v1940, 16
        %v2271 = vrot.slane %v2269, 4
        %v2272 = vor.u32 %v2271, %v2267
        %v2273 = vrot.slane %v2272, 4
        %v2275 = vshll.u32 %v1941, 16
        %v2277 = vrot.slane %v2275, 5
        %v2278 = vsel %vm615, %v2273, %v2277
        %v2280 = vshrl.u32 %v1942, 16
        %v2282 = vrot.slane %v2280, 4
        %v2283 = vshll.u32 %v1942, 16
        %v2285 = vrot.slane %v2283, 5
        %v2286 = vor.u32 %v2282, %v2285
        %v2287 = vrot.slane %v2286, 4
        %v2289 = vshll.u32 %v1943, 16
        %v2291 = vrot.slane %v2289, 5
        %v2292 = vsel %vm615, %v2287, %v2291
        %v2293 = vshrl.u32 %v1943, 16
        %v2295 = vrot.slane %v2293, 4
        %v2296 = vor.u32 %v2295, %v2291
        %v2297 = vrot.slane %v2296, 4
        %v2299 = vshll.u32 %v1944, 16
        %v2301 = vrot.slane %v2299, 5
        %v2302 = vsel %vm615, %v2297, %v2301
        %v2303 = vld [vmem:[#allocation2] sm:$0xff]
        %v2304 = vld [vmem:[#allocation2 + $0x8] sm:$0xff]
        %v2305 = vld [vmem:[#allocation2 + $0x10] sm:$0xff]
        %v2306 = vld [vmem:[#allocation2 + $0x18] sm:$0xff]
        %v2307 = vld [vmem:[#allocation2 + $0x20] sm:$0xff]
        %v2308 = vld [vmem:[#allocation2 + $0x28] sm:$0xff]
        %v2309 = vld [vmem:[#allocation2 + $0x30] sm:$0xff]
        %v2310 = vld [vmem:[#allocation2 + $0x38] sm:$0xff]
        %v2311 = vld [vmem:[#allocation2 + $0x40] sm:$0xff]
        %v2312 = vld [vmem:[#allocation2 + $0x48] sm:$0xff]
        %v2313 = vld [vmem:[#allocation2 + $0x50] sm:$0xff]
        %v2314 = vld [vmem:[#allocation2 + $0x58] sm:$0xff]
        %v2315 = vld [vmem:[#allocation2 + $0x60] sm:$0xff]
        %v2316 = vld [vmem:[#allocation2 + $0x68] sm:$0xff]
        %v2317 = vld [vmem:[#allocation2 + $0x70] sm:$0xff]
        %v2318 = vld [vmem:[#allocation2 + $0x78] sm:$0xff]
        %s2319 = scalar_lea.vmem %s3, 14
        %v2320 = vld [vmem:[%s2319] sm:$0x3]
        %v2321 = vunpack.c.l.b16 %v2124
        %v2322 = vunpack.c.l.b16 %v2134
        %v2323 = vunpack.c.l.b16 %v2148
        %v2324 = vunpack.c.l.b16 %v2158
        %v2325 = vunpack.c.l.b16 %v2172
        %v2326 = vunpack.c.l.b16 %v2182
        %v2327 = vunpack.c.l.b16 %v2196
        %v2328 = vunpack.c.l.b16 %v2206
        %v2329 = vunpack.c.l.b16 %v2220
        %v2330 = vunpack.c.l.b16 %v2230
        %v2331 = vunpack.c.l.b16 %v2244
        %v2332 = vunpack.c.l.b16 %v2254
        %v2333 = vunpack.c.l.b16 %v2268
        %v2334 = vunpack.c.l.b16 %v2278
        %v2335 = vunpack.c.l.b16 %v2292
        %v2336 = vunpack.c.l.b16 %v2302
        %v2337 = vpack.c.b16 %v2322, %v2321
        %v2338 = vpack.c.b16 %v2324, %v2323
        %v2339 = vpack.c.b16 %v2326, %v2325
        %v2340 = vpack.c.b16 %v2328, %v2327
        %v2341 = vpack.c.b16 %v2330, %v2329
        %v2342 = vpack.c.b16 %v2332, %v2331
        %v2343 = vpack.c.b16 %v2334, %v2333
        %v2344 = vpack.c.b16 %v2336, %v2335
        %v2346 = vsel %vm503, %v2337, 0
        %v2349 = vsel %vm503, %v2338, 0
        %v2352 = vsel %vm503, %v2339, 0
        %v2355 = vsel %vm503, %v2340, 0
        %v2358 = vsel %vm503, %v2341, 0
        %v2361 = vsel %vm503, %v2342, 0
        %v2364 = vsel %vm503, %v2343, 0
        %v2367 = vsel %vm503, %v2344, 0
        %v2370 = vsel %vm528, %v2320, 0
        %2372 = vmatpush.bf16.msra.mxu0 0
        %2373 = vmatpush.bf16.msra.mxu0 0
        %2374 = vmatpush.bf16.msra.mxu0 0
        %2375 = vmatpush.bf16.msra.mxu0 0
        %2376 = vmatpush.bf16.msra.mxu0 0
        %2377 = vmatpush.bf16.msra.mxu0 0
        %2378 = vmatpush.bf16.msra.mxu0 0
        %2379 = vmatpush.bf16.msra.mxu0 %v2370
        %2380 = vmatmul.bf16.gmra.mxu0 %v2346
        %v2381 = vpop.f32.mrf.mxu0
        %v2382 = vadd.f32 0.0, %v2381
        %v2383 = vpop.f32.mrf.mxu0
        %v2384 = vadd.f32 0.0, %v2383
        %2385 = vmatmul.bf16.gmra.mxu0 %v2349
        %v2386 = vpop.f32.mrf.mxu0
        %v2387 = vadd.f32 0.0, %v2386
        %v2388 = vpop.f32.mrf.mxu0
        %v2389 = vadd.f32 0.0, %v2388
        %2390 = vmatmul.bf16.gmra.mxu0 %v2352
        %v2391 = vpop.f32.mrf.mxu0
        %v2392 = vadd.f32 0.0, %v2391
        %v2393 = vpop.f32.mrf.mxu0
        %v2394 = vadd.f32 0.0, %v2393
        %2395 = vmatmul.bf16.gmra.mxu0 %v2355
        %v2396 = vpop.f32.mrf.mxu0
        %v2397 = vadd.f32 0.0, %v2396
        %v2398 = vpop.f32.mrf.mxu0
        %v2399 = vadd.f32 0.0, %v2398
        %2400 = vmatmul.bf16.gmra.mxu0 %v2358
        %v2401 = vpop.f32.mrf.mxu0
        %v2402 = vadd.f32 0.0, %v2401
        %v2403 = vpop.f32.mrf.mxu0
        %v2404 = vadd.f32 0.0, %v2403
        %2405 = vmatmul.bf16.gmra.mxu0 %v2361
        %v2406 = vpop.f32.mrf.mxu0
        %v2407 = vadd.f32 0.0, %v2406
        %v2408 = vpop.f32.mrf.mxu0
        %v2409 = vadd.f32 0.0, %v2408
        %2410 = vmatmul.bf16.gmra.mxu0 %v2364
        %v2411 = vpop.f32.mrf.mxu0
        %v2412 = vadd.f32 0.0, %v2411
        %v2413 = vpop.f32.mrf.mxu0
        %v2414 = vadd.f32 0.0, %v2413
        %2415 = vmatmul.bf16.gmra.mxu0 %v2367
        %v2416 = vpop.f32.mrf.mxu0
        %v2417 = vadd.f32 0.0, %v2416
        %v2418 = vpop.f32.mrf.mxu0
        %v2419 = vadd.f32 0.0, %v2418
        %2420 = vdwg.mxu0
        %v2421 = vadd.f32 %v2303, %v2382
        %v2422 = vadd.f32 %v2304, %v2384
        %v2423 = vadd.f32 %v2305, %v2387
        %v2424 = vadd.f32 %v2306, %v2389
        %v2425 = vadd.f32 %v2307, %v2392
        %v2426 = vadd.f32 %v2308, %v2394
        %v2427 = vadd.f32 %v2309, %v2397
        %v2428 = vadd.f32 %v2310, %v2399
        %v2429 = vadd.f32 %v2311, %v2402
        %v2430 = vadd.f32 %v2312, %v2404
        %v2431 = vadd.f32 %v2313, %v2407
        %v2432 = vadd.f32 %v2314, %v2409
        %v2433 = vadd.f32 %v2315, %v2412
        %v2434 = vadd.f32 %v2316, %v2414
        %v2435 = vadd.f32 %v2317, %v2417
        %v2436 = vadd.f32 %v2318, %v2419
        %2437 = vst [vmem:[#allocation2] sm:$0xff] %v2421
        %2438 = vst [vmem:[#allocation2 + $0x8] sm:$0xff] %v2422
        %2439 = vst [vmem:[#allocation2 + $0x10] sm:$0xff] %v2423
        %2440 = vst [vmem:[#allocation2 + $0x18] sm:$0xff] %v2424
        %2441 = vst [vmem:[#allocation2 + $0x20] sm:$0xff] %v2425
        %2442 = vst [vmem:[#allocation2 + $0x28] sm:$0xff] %v2426
        %2443 = vst [vmem:[#allocation2 + $0x30] sm:$0xff] %v2427
        %2444 = vst [vmem:[#allocation2 + $0x38] sm:$0xff] %v2428
        %2445 = vst [vmem:[#allocation2 + $0x40] sm:$0xff] %v2429
        %2446 = vst [vmem:[#allocation2 + $0x48] sm:$0xff] %v2430
        %2447 = vst [vmem:[#allocation2 + $0x50] sm:$0xff] %v2431
        %2448 = vst [vmem:[#allocation2 + $0x58] sm:$0xff] %v2432
        %2449 = vst [vmem:[#allocation2 + $0x60] sm:$0xff] %v2433
        %2450 = vst [vmem:[#allocation2 + $0x68] sm:$0xff] %v2434
        %2451 = vst [vmem:[#allocation2 + $0x70] sm:$0xff] %v2435
        %2452 = vst [vmem:[#allocation2 + $0x78] sm:$0xff] %v2436
        %v2461 = vrot.slane %v1921, 5
        %v2462 = vrot.slane %v2461, 4
        %v2463 = vrot.slane %v1922, 5
        %v2464 = vsel %vm968, %v2462, %v2463
        %v2465 = vrot.slane %v2463, 4
        %v2466 = vrot.slane %v1923, 5
        %v2467 = vsel %vm968, %v2465, %v2466
        %v2468 = vrot.slane %v1924, 5
        %v2469 = vrot.slane %v2468, 4
        %v2470 = vrot.slane %v1925, 5
        %v2471 = vsel %vm968, %v2469, %v2470
        %v2472 = vrot.slane %v2470, 4
        %v2473 = vrot.slane %v1926, 5
        %v2474 = vsel %vm968, %v2472, %v2473
        %v2475 = vrot.slane %v1927, 5
        %v2476 = vrot.slane %v2475, 4
        %v2477 = vrot.slane %v1928, 5
        %v2478 = vsel %vm968, %v2476, %v2477
        %v2479 = vrot.slane %v2477, 4
        %v2480 = vrot.slane %v1929, 5
        %v2481 = vsel %vm968, %v2479, %v2480
        %v2482 = vrot.slane %v1930, 5
        %v2483 = vrot.slane %v2482, 4
        %v2484 = vrot.slane %v1931, 5
        %v2485 = vsel %vm968, %v2483, %v2484
        %v2486 = vrot.slane %v2484, 4
        %v2487 = vrot.slane %v1932, 5
        %v2488 = vsel %vm968, %v2486, %v2487
        %v2489 = vrot.slane %v1933, 5
        %v2490 = vrot.slane %v2489, 4
        %v2491 = vrot.slane %v1934, 5
        %v2492 = vsel %vm968, %v2490, %v2491
        %v2493 = vrot.slane %v2491, 4
        %v2494 = vrot.slane %v1935, 5
        %v2495 = vsel %vm968, %v2493, %v2494
        %v2496 = vrot.slane %v1936, 5
        %v2497 = vrot.slane %v2496, 4
        %v2498 = vrot.slane %v1937, 5
        %v2499 = vsel %vm968, %v2497, %v2498
        %v2500 = vrot.slane %v2498, 4
        %v2501 = vrot.slane %v1938, 5
        %v2502 = vsel %vm968, %v2500, %v2501
        %v2503 = vrot.slane %v1939, 5
        %v2504 = vrot.slane %v2503, 4
        %v2505 = vrot.slane %v1940, 5
        %v2506 = vsel %vm968, %v2504, %v2505
        %v2507 = vrot.slane %v2505, 4
        %v2508 = vrot.slane %v1941, 5
        %v2509 = vsel %vm968, %v2507, %v2508
        %v2510 = vrot.slane %v1942, 5
        %v2511 = vrot.slane %v2510, 4
        %v2512 = vrot.slane %v1943, 5
        %v2513 = vsel %vm968, %v2511, %v2512
        %v2514 = vrot.slane %v2512, 4
        %v2515 = vrot.slane %v1944, 5
        %v2516 = vsel %vm968, %v2514, %v2515
        %v2517 = vld [vmem:[#allocation2] sm:$0xff]
        %v2518 = vld [vmem:[#allocation2 + $0x8] sm:$0xff]
        %v2519 = vld [vmem:[#allocation2 + $0x10] sm:$0xff]
        %v2520 = vld [vmem:[#allocation2 + $0x18] sm:$0xff]
        %v2521 = vld [vmem:[#allocation2 + $0x20] sm:$0xff]
        %v2522 = vld [vmem:[#allocation2 + $0x28] sm:$0xff]
        %v2523 = vld [vmem:[#allocation2 + $0x30] sm:$0xff]
        %v2524 = vld [vmem:[#allocation2 + $0x38] sm:$0xff]
        %v2525 = vld [vmem:[#allocation2 + $0x40] sm:$0xff]
        %v2526 = vld [vmem:[#allocation2 + $0x48] sm:$0xff]
        %v2527 = vld [vmem:[#allocation2 + $0x50] sm:$0xff]
        %v2528 = vld [vmem:[#allocation2 + $0x58] sm:$0xff]
        %v2529 = vld [vmem:[#allocation2 + $0x60] sm:$0xff]
        %v2530 = vld [vmem:[#allocation2 + $0x68] sm:$0xff]
        %v2531 = vld [vmem:[#allocation2 + $0x70] sm:$0xff]
        %v2532 = vld [vmem:[#allocation2 + $0x78] sm:$0xff]
        %s2533 = scalar_lea.vmem %s3, 16
        %v2534 = vld [vmem:[%s2533] sm:$0x3]
        %v2535 = vunpack.c.l.b16 %v2464
        %v2536 = vunpack.c.l.b16 %v2467
        %v2537 = vunpack.c.l.b16 %v2471
        %v2538 = vunpack.c.l.b16 %v2474
        %v2539 = vunpack.c.l.b16 %v2478
        %v2540 = vunpack.c.l.b16 %v2481
        %v2541 = vunpack.c.l.b16 %v2485
        %v2542 = vunpack.c.l.b16 %v2488
        %v2543 = vunpack.c.l.b16 %v2492
        %v2544 = vunpack.c.l.b16 %v2495
        %v2545 = vunpack.c.l.b16 %v2499
        %v2546 = vunpack.c.l.b16 %v2502
        %v2547 = vunpack.c.l.b16 %v2506
        %v2548 = vunpack.c.l.b16 %v2509
        %v2549 = vunpack.c.l.b16 %v2513
        %v2550 = vunpack.c.l.b16 %v2516
        %v2551 = vpack.c.b16 %v2536, %v2535
        %v2552 = vpack.c.b16 %v2538, %v2537
        %v2553 = vpack.c.b16 %v2540, %v2539
        %v2554 = vpack.c.b16 %v2542, %v2541
        %v2555 = vpack.c.b16 %v2544, %v2543
        %v2556 = vpack.c.b16 %v2546, %v2545
        %v2557 = vpack.c.b16 %v2548, %v2547
        %v2558 = vpack.c.b16 %v2550, %v2549
        %v2560 = vsel %vm503, %v2551, 0
        %v2563 = vsel %vm503, %v2552, 0
        %v2566 = vsel %vm503, %v2553, 0
        %v2569 = vsel %vm503, %v2554, 0
        %v2572 = vsel %vm503, %v2555, 0
        %v2575 = vsel %vm503, %v2556, 0
        %v2578 = vsel %vm503, %v2557, 0
        %v2581 = vsel %vm503, %v2558, 0
        %v2584 = vsel %vm528, %v2534, 0
        %2586 = vmatpush.bf16.msra.mxu0 0
        %2587 = vmatpush.bf16.msra.mxu0 0
        %2588 = vmatpush.bf16.msra.mxu0 0
        %2589 = vmatpush.bf16.msra.mxu0 0
        %2590 = vmatpush.bf16.msra.mxu0 0
        %2591 = vmatpush.bf16.msra.mxu0 0
        %2592 = vmatpush.bf16.msra.mxu0 0
        %2593 = vmatpush.bf16.msra.mxu0 %v2584
        %2594 = vmatmul.bf16.gmra.mxu0 %v2560
        %v2595 = vpop.f32.mrf.mxu0
        %v2596 = vadd.f32 0.0, %v2595
        %v2597 = vpop.f32.mrf.mxu0
        %v2598 = vadd.f32 0.0, %v2597
        %2599 = vmatmul.bf16.gmra.mxu0 %v2563
        %v2600 = vpop.f32.mrf.mxu0
        %v2601 = vadd.f32 0.0, %v2600
        %v2602 = vpop.f32.mrf.mxu0
        %v2603 = vadd.f32 0.0, %v2602
        %2604 = vmatmul.bf16.gmra.mxu0 %v2566
        %v2605 = vpop.f32.mrf.mxu0
        %v2606 = vadd.f32 0.0, %v2605
        %v2607 = vpop.f32.mrf.mxu0
        %v2608 = vadd.f32 0.0, %v2607
        %2609 = vmatmul.bf16.gmra.mxu0 %v2569
        %v2610 = vpop.f32.mrf.mxu0
        %v2611 = vadd.f32 0.0, %v2610
        %v2612 = vpop.f32.mrf.mxu0
        %v2613 = vadd.f32 0.0, %v2612
        %2614 = vmatmul.bf16.gmra.mxu0 %v2572
        %v2615 = vpop.f32.mrf.mxu0
        %v2616 = vadd.f32 0.0, %v2615
        %v2617 = vpop.f32.mrf.mxu0
        %v2618 = vadd.f32 0.0, %v2617
        %2619 = vmatmul.bf16.gmra.mxu0 %v2575
        %v2620 = vpop.f32.mrf.mxu0
        %v2621 = vadd.f32 0.0, %v2620
        %v2622 = vpop.f32.mrf.mxu0
        %v2623 = vadd.f32 0.0, %v2622
        %2624 = vmatmul.bf16.gmra.mxu0 %v2578
        %v2625 = vpop.f32.mrf.mxu0
        %v2626 = vadd.f32 0.0, %v2625
        %v2627 = vpop.f32.mrf.mxu0
        %v2628 = vadd.f32 0.0, %v2627
        %2629 = vmatmul.bf16.gmra.mxu0 %v2581
        %v2630 = vpop.f32.mrf.mxu0
        %v2631 = vadd.f32 0.0, %v2630
        %v2632 = vpop.f32.mrf.mxu0
        %v2633 = vadd.f32 0.0, %v2632
        %2634 = vdwg.mxu0
        %v2635 = vadd.f32 %v2517, %v2596
        %v2636 = vadd.f32 %v2518, %v2598
        %v2637 = vadd.f32 %v2519, %v2601
        %v2638 = vadd.f32 %v2520, %v2603
        %v2639 = vadd.f32 %v2521, %v2606
        %v2640 = vadd.f32 %v2522, %v2608
        %v2641 = vadd.f32 %v2523, %v2611
        %v2642 = vadd.f32 %v2524, %v2613
        %v2643 = vadd.f32 %v2525, %v2616
        %v2644 = vadd.f32 %v2526, %v2618
        %v2645 = vadd.f32 %v2527, %v2621
        %v2646 = vadd.f32 %v2528, %v2623
        %v2647 = vadd.f32 %v2529, %v2626
        %v2648 = vadd.f32 %v2530, %v2628
        %v2649 = vadd.f32 %v2531, %v2631
        %v2650 = vadd.f32 %v2532, %v2633
        %2651 = vst [vmem:[#allocation2] sm:$0xff] %v2635
        %2652 = vst [vmem:[#allocation2 + $0x8] sm:$0xff] %v2636
        %2653 = vst [vmem:[#allocation2 + $0x10] sm:$0xff] %v2637
        %2654 = vst [vmem:[#allocation2 + $0x18] sm:$0xff] %v2638
        %2655 = vst [vmem:[#allocation2 + $0x20] sm:$0xff] %v2639
        %2656 = vst [vmem:[#allocation2 + $0x28] sm:$0xff] %v2640
        %2657 = vst [vmem:[#allocation2 + $0x30] sm:$0xff] %v2641
        %2658 = vst [vmem:[#allocation2 + $0x38] sm:$0xff] %v2642
        %2659 = vst [vmem:[#allocation2 + $0x40] sm:$0xff] %v2643
        %2660 = vst [vmem:[#allocation2 + $0x48] sm:$0xff] %v2644
        %2661 = vst [vmem:[#allocation2 + $0x50] sm:$0xff] %v2645
        %2662 = vst [vmem:[#allocation2 + $0x58] sm:$0xff] %v2646
        %2663 = vst [vmem:[#allocation2 + $0x60] sm:$0xff] %v2647
        %2664 = vst [vmem:[#allocation2 + $0x68] sm:$0xff] %v2648
        %2665 = vst [vmem:[#allocation2 + $0x70] sm:$0xff] %v2649
        %2666 = vst [vmem:[#allocation2 + $0x78] sm:$0xff] %v2650
        %v2667 = vld [vmem:[#allocation2] sm:$0xff]
        %v2668 = vld [vmem:[#allocation2 + $0x8] sm:$0xff]
        %v2669 = vld [vmem:[#allocation2 + $0x10] sm:$0xff]
        %v2670 = vld [vmem:[#allocation2 + $0x18] sm:$0xff]
        %v2671 = vld [vmem:[#allocation2 + $0x20] sm:$0xff]
        %v2672 = vld [vmem:[#allocation2 + $0x28] sm:$0xff]
        %v2673 = vld [vmem:[#allocation2 + $0x30] sm:$0xff]
        %v2674 = vld [vmem:[#allocation2 + $0x38] sm:$0xff]
        %v2675 = vld [vmem:[#allocation2 + $0x40] sm:$0xff]
        %v2676 = vld [vmem:[#allocation2 + $0x48] sm:$0xff]
        %v2677 = vld [vmem:[#allocation2 + $0x50] sm:$0xff]
        %v2678 = vld [vmem:[#allocation2 + $0x58] sm:$0xff]
        %v2679 = vld [vmem:[#allocation2 + $0x60] sm:$0xff]
        %v2680 = vld [vmem:[#allocation2 + $0x68] sm:$0xff]
        %v2681 = vld [vmem:[#allocation2 + $0x70] sm:$0xff]
        %v2682 = vld [vmem:[#allocation2 + $0x78] sm:$0xff]
        %v2683 = vld [vmem:[%s4] sm:$0x1]
        %v2685 = vperm.slane %v2683, 0
        %v2687 = vadd.f32 %v2667, %v2685
        %v2688 = vadd.f32 %v2668, %v2685
        %v2689 = vadd.f32 %v2669, %v2685
        %v2690 = vadd.f32 %v2670, %v2685
        %v2691 = vadd.f32 %v2671, %v2685
        %v2692 = vadd.f32 %v2672, %v2685
        %v2693 = vadd.f32 %v2673, %v2685
        %v2694 = vadd.f32 %v2674, %v2685
        %v2695 = vadd.f32 %v2675, %v2685
        %v2696 = vadd.f32 %v2676, %v2685
        %v2697 = vadd.f32 %v2677, %v2685
        %v2698 = vadd.f32 %v2678, %v2685
        %v2699 = vadd.f32 %v2679, %v2685
        %v2700 = vadd.f32 %v2680, %v2685
        %v2701 = vadd.f32 %v2681, %v2685
        %v2702 = vadd.f32 %v2682, %v2685
        %2703 = vst [vmem:[%s358] sm:$0xff] %v2687
        %2704 = vst [vmem:[%s358 + $0x8] sm:$0xff] %v2688
        %2705 = vst [vmem:[%s358 + $0x10] sm:$0xff] %v2689
        %2706 = vst [vmem:[%s358 + $0x18] sm:$0xff] %v2690
        %2707 = vst [vmem:[%s358 + $0x20] sm:$0xff] %v2691
        %2708 = vst [vmem:[%s358 + $0x28] sm:$0xff] %v2692
        %2709 = vst [vmem:[%s358 + $0x30] sm:$0xff] %v2693
        %2710 = vst [vmem:[%s358 + $0x38] sm:$0xff] %v2694
        %2711 = vst [vmem:[%s358 + $0x40] sm:$0xff] %v2695
        %2712 = vst [vmem:[%s358 + $0x48] sm:$0xff] %v2696
        %2713 = vst [vmem:[%s358 + $0x50] sm:$0xff] %v2697
        %2714 = vst [vmem:[%s358 + $0x58] sm:$0xff] %v2698
        %2715 = vst [vmem:[%s358 + $0x60] sm:$0xff] %v2699
        %2716 = vst [vmem:[%s358 + $0x68] sm:$0xff] %v2700
        %2717 = vst [vmem:[%s358 + $0x70] sm:$0xff] %v2701
        %2718 = vst [vmem:[%s358 + $0x78] sm:$0xff] %v2702
        %p2719 = scmp.eq.s32.totalorder %s30, 0
        // Predicated region
        $region41: #{tpu_custom_call.1} parent=39 // pred_check
          %p2720 = pneg %p2719
        $region42: #{tpu_custom_call.1} parent=39 // pred_check_branch
          %2722 = sbr.rel (%p2720) target = $region44
        $region43: #{tpu_custom_call.1} parent=39 // pred_region
          %2723 = vst [vmem:[%s364] sm:$0x1] 0.0
          %2724 = vst [vmem:[%s370] sm:$0x1] 0.0
        $region44: #{tpu_custom_call.1} parent=39 // pred_fallthru
          _
        %v2725 = vld [vmem:[%s364] sm:$0x1]
        %v2726 = vadd.f32 %v2687, %v2688
        %v2727 = vadd.f32 %v2726, %v2689
        %v2728 = vadd.f32 %v2727, %v2690
        %v2729 = vadd.f32 %v2728, %v2691
        %v2730 = vadd.f32 %v2729, %v2692
        %v2731 = vadd.f32 %v2730, %v2693
        %v2732 = vadd.f32 %v2731, %v2694
        %v2733 = vadd.f32 %v2732, %v2695
        %v2734 = vadd.f32 %v2733, %v2696
        %v2735 = vadd.f32 %v2734, %v2697
        %v2736 = vadd.f32 %v2735, %v2698
        %v2737 = vadd.f32 %v2736, %v2699
        %v2738 = vadd.f32 %v2737, %v2700
        %v2739 = vadd.f32 %v2738, %v2701
        %v2740 = vadd.f32 %v2739, %v2702
        %v2741 = vrot.slane %v2740, 4
        %v2742 = vadd.f32 %v2740, %v2741
        %v2743 = vrot.slane %v2742, 2
        %v2744 = vadd.f32 %v2742, %v2743
        %v2745 = vrot.slane %v2744, 1
        %v2746 = vadd.f32 %v2744, %v2745
        %v2747 = vadd.f32 %v2725, %v2746
        %2748 = vst [vmem:[%s364] sm:$0x1] %v2747
        %v2749 = vld [vmem:[%s370] sm:$0x1]
        %v2750 = vmul.f32 %v2687, %v2687
        %v2751 = vmul.f32 %v2688, %v2688
        %v2752 = vmul.f32 %v2689, %v2689
        %v2753 = vmul.f32 %v2690, %v2690
        %v2754 = vmul.f32 %v2691, %v2691
        %v2755 = vmul.f32 %v2692, %v2692
        %v2756 = vmul.f32 %v2693, %v2693
        %v2757 = vmul.f32 %v2694, %v2694
        %v2758 = vmul.f32 %v2695, %v2695
        %v2759 = vmul.f32 %v2696, %v2696
        %v2760 = vmul.f32 %v2697, %v2697
        %v2761 = vmul.f32 %v2698, %v2698
        %v2762 = vmul.f32 %v2699, %v2699
        %v2763 = vmul.f32 %v2700, %v2700
        %v2764 = vmul.f32 %v2701, %v2701
        %v2765 = vmul.f32 %v2702, %v2702
        %v2766 = vadd.f32 %v2750, %v2751
        %v2767 = vadd.f32 %v2766, %v2752
        %v2768 = vadd.f32 %v2767, %v2753
        %v2769 = vadd.f32 %v2768, %v2754
        %v2770 = vadd.f32 %v2769, %v2755
        %v2771 = vadd.f32 %v2770, %v2756
        %v2772 = vadd.f32 %v2771, %v2757
        %v2773 = vadd.f32 %v2772, %v2758
        %v2774 = vadd.f32 %v2773, %v2759
        %v2775 = vadd.f32 %v2774, %v2760
        %v2776 = vadd.f32 %v2775, %v2761
        %v2777 = vadd.f32 %v2776, %v2762
        %v2778 = vadd.f32 %v2777, %v2763
        %v2779 = vadd.f32 %v2778, %v2764
        %v2780 = vadd.f32 %v2779, %v2765
        %v2781 = vrot.slane %v2780, 4
        %v2782 = vadd.f32 %v2780, %v2781
        %v2783 = vrot.slane %v2782, 2
        %v2784 = vadd.f32 %v2782, %v2783
        %v2785 = vrot.slane %v2784, 1
        %v2786 = vadd.f32 %v2784, %v2785
        %v2787 = vadd.f32 %v2749, %v2786
        %2788 = vst [vmem:[%s370] sm:$0x1] %v2787
        %s2789 = sand.u32 %s173, 1
        %s2790 = scalar_lea.sflag [#allocation4], %s2789
        %s2791 = sand.u32 %s173, 1
        %s2792 = smul.addr %s2791, 128
        %s2793 = scalar_lea.vmem [#allocation3], %s2792
        %s2794 = sand.u32 %s25, 1
        %s2795 = scalar_lea.sflag [#allocation6], %s2794
        %s2796 = sand.u32 %s199, 1
        %s2797 = scalar_lea.vmem [#allocation5], %s2796
        %s2798 = sand.u32 %s25, 1
        %s2799 = scalar_lea.sflag [#allocation6], %s2798
        %s2800 = sand.u32 %s225, 1
        %s2801 = scalar_lea.vmem [#allocation7], %s2800
        // Predicated region
        $region45: #{tpu_custom_call.1} parent=39 // pred_check
          %p2802 = pneg %p183
        $region46: #{tpu_custom_call.1} parent=39 // pred_check_branch
          %2804 = sbr.rel (%p2802) target = $region48
        $region47: #{tpu_custom_call.1} parent=39 // pred_region
          %s2805 = smul.u32 16, %s30
          %2807 = vsyncadd %s2790, 0
          %s2808 = smul.addr %s29, 32
          %s2809 = sadd.s32 %s2805, %s2808
          %s2810 = smul.addr %s2809, 8
          %s2811 = scalar_lea.hbm %s5, %s2810
          %s2812 = sshll.u32 %s2793, 4
          %s2813 = int_to_ptr.vmem [resolvable:$true] %s2812
          %s2814 = sshll.u32 %s2811, 4
          %s2815 = int_to_ptr.hbm [resolvable:$true] %s2814
          %2820 = dma.vmem_to_hbm [thread:$0]  %s2813, 2048, %s2815, %s2790, 128, 128, 8
        $region48: #{tpu_custom_call.1} parent=39 // pred_fallthru
          _
        // Predicated region
        $region49: #{tpu_custom_call.1} parent=39 // pred_check
          %p2821 = pneg %p209
        $region50: #{tpu_custom_call.1} parent=39 // pred_check_branch
          %2823 = sbr.rel (%p2821) target = $region52
        $region51: #{tpu_custom_call.1} parent=39 // pred_region
          %2825 = vsyncadd %s2795, 0
          %s2826 = scalar_lea.hbm %s6, %s29
          %s2828 = sshll.u32 %s2797, 4
          %s2829 = int_to_ptr.vmem [resolvable:$true] %s2828
          %s2830 = sshll.u32 %s2826, 4
          %s2831 = int_to_ptr.hbm [resolvable:$true] %s2830
          %2833 = dma.vmem_to_hbm [thread:$0]  %s2829, 16, %s2831, %s2795
        $region52: #{tpu_custom_call.1} parent=39 // pred_fallthru
          _
        // Predicated region
        $region53: #{tpu_custom_call.1} parent=39 // pred_check
          %p2834 = pneg %p235
        $region54: #{tpu_custom_call.1} parent=39 // pred_check_branch
          %2836 = sbr.rel (%p2834) target = $region56
        $region55: #{tpu_custom_call.1} parent=39 // pred_region
          %2838 = vsyncadd %s2799, 0
          %s2839 = scalar_lea.hbm %s7, %s29
          %s2841 = sshll.u32 %s2801, 4
          %s2842 = int_to_ptr.vmem [resolvable:$true] %s2841
          %s2843 = sshll.u32 %s2839, 4
          %s2844 = int_to_ptr.hbm [resolvable:$true] %s2843
          %2846 = dma.vmem_to_hbm [thread:$0]  %s2842, 16, %s2844, %s2799
        $region56: #{tpu_custom_call.1} parent=39 // pred_fallthru
          _
      $region40: #{tpu_custom_call.1} parent=5 // pred_fallthru
        _
      %p2847 = scmp.le.s32.totalorder 2, %s20
      // Predicated region
      $region57: #{tpu_custom_call.1} parent=5 // pred_check
        %p2848 = pneg %p2847
      $region58: #{tpu_custom_call.1} parent=5 // pred_check_branch
        %2850 = sbr.rel (%p2848) target = $region60
      $region59: #{tpu_custom_call.1} parent=5 // pred_region
        %s2851 = ssub.s32 %s20, 2
        // Predicated region
        $region61: #{tpu_custom_call.1} parent=59 // pred_check
          %p2852 = pneg %p189
        $region62: #{tpu_custom_call.1} parent=59 // pred_check_branch
          %2854 = sbr.rel (%p2852) target = $region64
        $region63: #{tpu_custom_call.1} parent=59 // pred_region
          %s2855 = sand.u32 %s174, 1
          %s2856 = scalar_lea.sflag [#allocation4], %s2855
          %s2857 = sand.u32 %s174, 1
          %s2858 = smul.addr %s2857, 128
          %s2859 = scalar_lea.vmem [#allocation3], %s2858
          %2861 = dma.done %s2856, 2048
        $region64: #{tpu_custom_call.1} parent=59 // pred_fallthru
          _
        // Predicated region
        $region65: #{tpu_custom_call.1} parent=59 // pred_check
          %p2862 = pneg %p215
        $region66: #{tpu_custom_call.1} parent=59 // pred_check_branch
          %2864 = sbr.rel (%p2862) target = $region68
        $region67: #{tpu_custom_call.1} parent=59 // pred_region
          %s2865 = sand.u32 %s26, 1
          %s2866 = scalar_lea.sflag [#allocation6], %s2865
          %s2867 = sand.u32 %s200, 1
          %s2868 = scalar_lea.vmem [#allocation5], %s2867
          %2870 = dma.done %s2866, 16
        $region68: #{tpu_custom_call.1} parent=59 // pred_fallthru
          _
        // Predicated region
        $region69: #{tpu_custom_call.1} parent=59 // pred_check
          %p2871 = pneg %p241
        $region70: #{tpu_custom_call.1} parent=59 // pred_check_branch
          %2873 = sbr.rel (%p2871) target = $region72
        $region71: #{tpu_custom_call.1} parent=59 // pred_region
          %s2874 = sand.u32 %s26, 1
          %s2875 = scalar_lea.sflag [#allocation6], %s2874
          %s2876 = sand.u32 %s226, 1
          %s2877 = scalar_lea.vmem [#allocation7], %s2876
          %2879 = dma.done %s2875, 16
        $region72: #{tpu_custom_call.1} parent=59 // pred_fallthru
          _
      $region60: #{tpu_custom_call.1} parent=5 // pred_fallthru
        _
    $region6: #{tpu_custom_call.1} parent=1 // loop_footer
      %s24 = sadd.s32 1, %s20
    $region7: #{tpu_custom_call.1} parent=1 // loop_footer_branch
      %19 = sbr.rel target = $region3
    $region8: #{tpu_custom_call.1} parent=1 // loop_exit
      _
    %2880 = vsyncpa [#allocation4], 1
    %s2881 = scalar_lea.sflag [#allocation4], 1
    %2882 = vsyncpa %s2881, 1
    %2883 = vsyncpa [#allocation6], 1
    %s2884 = scalar_lea.sflag [#allocation6], 1
    %2885 = vsyncpa %s2884, 1

</llo_original>
